<compile_context>
chip_gen: v5e
topology: v5e:2x2
jax: 0.10.0
libtpu: 0.0.40
codegen_flags: <defaults>
</compile_context>

<pallas_src>
import math
from functools import partial

import jax
import jax.numpy as jnp
from jax.experimental import pallas as pl
from jax.experimental.pallas import tpu as pltpu


# ---------------------------------------------------------------------------
# Fused multi-head attention + relative-rotation kernel (one tile of sequences)
# ---------------------------------------------------------------------------
def _coord_attn_kernel(x_ref, pos_ref, wqk_ref, bqk_ref, wv_ref, bv_ref,
                       wo2_ref, bo2_ref, cos_ref, sin_ref, o_ref, *, heads):
    tb, L, E = x_ref.shape
    dh = E // heads
    scale = 1.0 / math.sqrt(dh)

    # ---- fused Q/K projection: one lane-dense (E, 2E) GEMM, bf16 x bf16 -> f32 ----
    x2 = x_ref[...].reshape(tb * L, E)                                   # bf16
    qk = jnp.dot(x2, wqk_ref[...], preferred_element_type=jnp.float32) + bqk_ref[...]
    q = (qk[:, :E] * scale).reshape(tb, L, E)
    k = qk[:, E:].reshape(tb, L, E)

    # ---- value = projection of the (batch-shared) positional encoding ----
    v = jnp.dot(pos_ref[...], wv_ref[...],
                preferred_element_type=jnp.float32) + bv_ref[...]        # (L, E) f32

    # ---- per-head scaled-dot-product attention (heads is small & static) ----
    head_outs = []
    for h in range(heads):
        lo = h * dh
        qh = q[:, :, lo:lo + dh].astype(jnp.bfloat16)                    # (tb, L, dh)
        kh = k[:, :, lo:lo + dh].astype(jnp.bfloat16)                    # (tb, L, dh)
        s = jnp.einsum('bld,bmd->blm', qh, kh,
                       preferred_element_type=jnp.float32)               # (tb, L, L)
        s = s - jnp.max(s, axis=-1, keepdims=True)
        p = jnp.exp(s)
        p = p / jnp.sum(p, axis=-1, keepdims=True)
        vh = v[:, lo:lo + dh].astype(jnp.bfloat16)                       # (L, dh)
        oh = jnp.dot(p.reshape(tb * L, L).astype(jnp.bfloat16), vh,
                     preferred_element_type=jnp.float32)                 # (tb*L, dh)
        head_outs.append(oh.reshape(tb, L, dh))
    att = jnp.concatenate(head_outs, axis=-1)                            # (tb, L, E) f32

    # ---- out-projection (plain + pair-swapped columns) + relative rotation ----
    o2 = jnp.dot(att.reshape(tb * L, E).astype(jnp.bfloat16), wo2_ref[...],
                 preferred_element_type=jnp.float32) + bo2_ref[...]      # (tb*L, 2E)
    o = o2[:, :E].reshape(tb, L, E)
    osw = o2[:, E:].reshape(tb, L, E)
    out = o * cos_ref[...][None, :, :] + osw * sin_ref[...][None, :, :]
    o_ref[...] = out.astype(o_ref.dtype)


# ---------------------------------------------------------------------------
# Positional-encoding tables (equivalent to PositionalEncoding.__init__ sliced to L)
# ---------------------------------------------------------------------------
def _pos_tables(L, E):
    pos = jnp.arange(1, L + 1, dtype=jnp.float32)[:, None]               # (L, 1)
    denom = jnp.power(10000.0, jnp.arange(0, E, 2, dtype=jnp.float32) / E)
    ang = pos / denom                                                    # (L, E/2)
    sinx = jnp.sin(ang)
    cosx = jnp.cos(ang)
    # P[:, 0::2] = sin, P[:, 1::2] = cos  (interleaved)
    P = jnp.stack([sinx, cosx], axis=-1).reshape(L, E)
    # interleaved tables for the relative rotation epilogue
    cos_full = jnp.repeat(cosx, 2, axis=1)                               # [c0,c0,c1,c1,...]
    sin_signed = jnp.stack([-sinx, sinx], axis=-1).reshape(L, E)         # [-s0,+s0,-s1,+s1,...]
    return P, cos_full, sin_signed


def _pick_tb(sb):
    # >= 2 parallel grid steps when possible (v7x has 2 TensorCores); cap tile size.
    if sb <= 1:
        return 1
    return max(1, min(64, (sb + 1) // 2))


# ---------------------------------------------------------------------------
# One attention direction: (SB, L, E) sequences -> rotated attention output
# ---------------------------------------------------------------------------
def _attend(params, x_seq):
    SB, L, E = x_seq.shape
    heads = params["heads"]
    P, cos_full, sin_signed = _pos_tables(L, E)

    TB = _pick_tb(SB)
    n_tiles = -(-SB // TB)
    SB_pad = n_tiles * TB
    if SB_pad != SB:
        x_seq = jnp.pad(x_seq, ((0, SB_pad - SB), (0, 0), (0, 0)))

    x_bf = x_seq.astype(jnp.bfloat16)
    pos_bf = P.astype(jnp.bfloat16)
    wqk = params["wqk"].astype(jnp.bfloat16)
    wv = params["wv"].astype(jnp.bfloat16)
    wo2 = params["wo2"].astype(jnp.bfloat16)
    bqk = params["bqk"].reshape(1, 2 * E)
    bv = params["bv"].reshape(1, E)
    bo2 = params["bo2"].reshape(1, 2 * E)

    out = pl.pallas_call(
        partial(_coord_attn_kernel, heads=heads),
        out_shape=jax.ShapeDtypeStruct((SB_pad, L, E), jnp.float32),
        grid=(n_tiles,),
        in_specs=[
            pl.BlockSpec((TB, L, E), lambda i: (i, 0, 0)),   # x tile
            pl.BlockSpec((L, E), lambda i: (0, 0)),          # positional encoding
            pl.BlockSpec((E, 2 * E), lambda i: (0, 0)),      # [Wq^T | Wk^T]
            pl.BlockSpec((1, 2 * E), lambda i: (0, 0)),      # [bq | bk]
            pl.BlockSpec((E, E), lambda i: (0, 0)),          # Wv^T
            pl.BlockSpec((1, E), lambda i: (0, 0)),          # bv
            pl.BlockSpec((E, 2 * E), lambda i: (0, 0)),      # [Wo^T | Wo^T pair-swapped]
            pl.BlockSpec((1, 2 * E), lambda i: (0, 0)),      # [bo | bo pair-swapped]
            pl.BlockSpec((L, E), lambda i: (0, 0)),          # cos (interleaved)
            pl.BlockSpec((L, E), lambda i: (0, 0)),          # signed sin (interleaved)
        ],
        out_specs=pl.BlockSpec((TB, L, E), lambda i: (i, 0, 0)),
        compiler_params=pltpu.CompilerParams(dimension_semantics=("parallel",)),
    )(x_bf, pos_bf, wqk, bqk, wv, bv, wo2, bo2, cos_full, sin_signed)
    return out[:SB]


# ---------------------------------------------------------------------------
# Parameters (deterministic, in-script; mirrors nn.MultiheadAttention init scheme)
# ---------------------------------------------------------------------------
def make_params(key, feature_size=128, enc_size=128, heads=4):
    E = feature_size
    assert E % heads == 0 and E % 2 == 0
    ks = jax.random.split(key, 4)
    xav = math.sqrt(6.0 / (E + 3 * E))            # xavier_uniform over (3E, E) in_proj_weight
    wq_t = jax.random.uniform(ks[0], (E, E), jnp.float32, -xav, xav)
    wk_t = jax.random.uniform(ks[1], (E, E), jnp.float32, -xav, xav)
    wv_t = jax.random.uniform(ks[2], (E, E), jnp.float32, -xav, xav)
    bq = jnp.zeros((E,), jnp.float32)             # in_proj_bias reset to 0 in PyTorch
    bk = jnp.zeros((E,), jnp.float32)
    bv = jnp.zeros((E,), jnp.float32)
    bnd = 1.0 / math.sqrt(E)
    wo_t = jax.random.uniform(ks[3], (E, E), jnp.float32, -bnd, bnd)
    bo = jnp.zeros((E,), jnp.float32)             # out_proj.bias reset to 0

    # Pair-swapped out-projection (output channels 2k <-> 2k+1) so the relative
    # rotation is pure elementwise work in the kernel epilogue.
    wo_sw = wo_t.reshape(E, E // 2, 2)[:, :, ::-1].reshape(E, E)
    bo_sw = bo.reshape(E // 2, 2)[:, ::-1].reshape(E)

    return {
        "feature_size": E,
        "enc_size": enc_size,
        "heads": heads,
        "wqk": jnp.concatenate([wq_t, wk_t], axis=1),     # (E, 2E)
        "bqk": jnp.concatenate([bq, bk]),                 # (2E,)
        "wv": wv_t,                                       # (E, E)
        "bv": bv,                                         # (E,)
        "wo2": jnp.concatenate([wo_t, wo_sw], axis=1),    # (E, 2E)
        "bo2": jnp.concatenate([bo, bo_sw]),              # (2E,)
    }


# ---------------------------------------------------------------------------
# Full CoordinateAttention forward
# ---------------------------------------------------------------------------
def coordinate_attention_forward(params, x):
    B, C, H, W = x.shape
    E = params["feature_size"]
    enc = params["enc_size"]
    assert C == E, (C, E)
    xf = x.astype(jnp.float32)

    # row sequences: (B*H, W, E); col sequences: (B*W, H, E)
    row_x = jnp.transpose(xf, (0, 2, 3, 1)).reshape(B * H, W, E)
    col_x = jnp.transpose(xf, (0, 3, 2, 1)).reshape(B * W, H, E)

    row_res = _attend(params, row_x)                              # (B*H, W, E)
    col_res = _attend(params, col_x)                              # (B*W, H, E)

    row_res = jnp.transpose(row_res.reshape(B, H, W, E)[:, :, :, :enc], (0, 3, 1, 2))
    col_res = jnp.transpose(col_res.reshape(B, W, H, E)[:, :, :, :enc], (0, 3, 2, 1))
    return jnp.concatenate([xf, row_res, col_res], axis=1)        # (B, C + 2*enc, H, W)


# ---------------------------------------------------------------------------
if __name__ == "__main__":
    key = jax.random.PRNGKey(0)
    pkey, xkey = jax.random.split(key)

    feature_size, enc_size, heads = 128, 128, 4     # module defaults
    B, H, W = 2, 8, 8

    params = make_params(pkey, feature_size, enc_size, heads)
    x = jax.random.normal(xkey, (B, feature_size, H, W), jnp.float32)   # NCHW like PyTorch

    fwd = jax.jit(partial(coordinate_attention_forward, params))
    out = fwd(x)
    jax.block_until_ready(out)

    assert out.shape == (B, feature_size + 2 * enc_size, H, W), out.shape
    assert out.dtype == jnp.float32
    assert bool(jnp.all(jnp.isfinite(out)))
    print("KERNEL_OK")
</pallas_src>

<mosaic_0001>
module attributes {stable_mosaic.version = 11 : i64} {
  func.func @_coord_attn_kernel(%arg0: i32, %arg1: memref<8x8x128xbf16, #tpu.memory_space<vmem>>, %arg2: memref<8x128xbf16, #tpu.memory_space<vmem>>, %arg3: memref<128x256xbf16, #tpu.memory_space<vmem>>, %arg4: memref<1x256xf32, #tpu.memory_space<vmem>>, %arg5: memref<128x128xbf16, #tpu.memory_space<vmem>>, %arg6: memref<1x128xf32, #tpu.memory_space<vmem>>, %arg7: memref<128x256xbf16, #tpu.memory_space<vmem>>, %arg8: memref<1x256xf32, #tpu.memory_space<vmem>>, %arg9: memref<8x128xf32, #tpu.memory_space<vmem>>, %arg10: memref<8x128xf32, #tpu.memory_space<vmem>>, %arg11: memref<8x8x128xf32, #tpu.memory_space<vmem>>) attributes {dimension_semantics = [#tpu.dimension_semantics<parallel>], iteration_bounds = array<i64: 2>, scalar_prefetch = 0 : i64, scratch_operands = 0 : i64, tpu.core_type = #tpu.core_type<tc>, window_params = [{transform_indices = @transform_0, window_bounds = array<i64: 8, 8, 128>}, {pipeline_mode = #tpu.pipeline_mode<synchronous>, transform_indices = @transform_1, window_bounds = array<i64: 8, 128>}, {pipeline_mode = #tpu.pipeline_mode<synchronous>, transform_indices = @transform_2, window_bounds = array<i64: 128, 256>}, {pipeline_mode = #tpu.pipeline_mode<synchronous>, transform_indices = @transform_3, window_bounds = array<i64: 1, 256>}, {pipeline_mode = #tpu.pipeline_mode<synchronous>, transform_indices = @transform_4, window_bounds = array<i64: 128, 128>}, {pipeline_mode = #tpu.pipeline_mode<synchronous>, transform_indices = @transform_5, window_bounds = array<i64: 1, 128>}, {pipeline_mode = #tpu.pipeline_mode<synchronous>, transform_indices = @transform_6, window_bounds = array<i64: 128, 256>}, {pipeline_mode = #tpu.pipeline_mode<synchronous>, transform_indices = @transform_7, window_bounds = array<i64: 1, 256>}, {pipeline_mode = #tpu.pipeline_mode<synchronous>, transform_indices = @transform_8, window_bounds = array<i64: 8, 128>}, {pipeline_mode = #tpu.pipeline_mode<synchronous>, transform_indices = @transform_9, window_bounds = array<i64: 8, 128>}, {transform_indices = @transform_10, window_bounds = array<i64: 8, 8, 128>}]} {
    %c0 = arith.constant 0 : index
    %c0_0 = arith.constant 0 : index
    %c0_1 = arith.constant 0 : index
    %0 = vector.load %arg1[%c0, %c0_0, %c0_1] : memref<8x8x128xbf16, #tpu.memory_space<vmem>>, vector<8x8x128xbf16>
    %1 = vector.shape_cast %0 : vector<8x8x128xbf16> to vector<64x128xbf16>
    %c0_2 = arith.constant 0 : index
    %c0_3 = arith.constant 0 : index
    %2 = vector.load %arg3[%c0_2, %c0_3] : memref<128x256xbf16, #tpu.memory_space<vmem>>, vector<128x256xbf16>
    %cst = arith.constant dense<0.000000e+00> : vector<64x256xf32>
    %3 = tpu.matmul %1, %2, %cst {dimension_numbers = #tpu.dot_dimension_numbers<[1], [0], [0], [1], [0, 0, 1, 1], [], []>} : vector<64x128xbf16>, vector<128x256xbf16>, vector<64x256xf32> -> vector<64x256xf32>
    %c0_4 = arith.constant 0 : index
    %c0_5 = arith.constant 0 : index
    %4 = vector.load %arg4[%c0_4, %c0_5] : memref<1x256xf32, #tpu.memory_space<vmem>>, vector<1x256xf32>
    %5 = vector.broadcast %4 : vector<1x256xf32> to vector<64x256xf32>
    %6 = arith.addf %3, %5 : vector<64x256xf32>
    %7 = vector.extract_strided_slice %6 {offsets = [0, 0], sizes = [64, 128], strides = [1, 1]} : vector<64x256xf32> to vector<64x128xf32>
    %cst_6 = arith.constant 0.176776692 : f32
    %8 = vector.broadcast %cst_6 : f32 to vector<64x128xf32>
    %9 = arith.mulf %7, %8 : vector<64x128xf32>
    %10 = vector.shape_cast %9 : vector<64x128xf32> to vector<8x8x128xf32>
    %11 = vector.extract_strided_slice %6 {offsets = [0, 128], sizes = [64, 128], strides = [1, 1]} : vector<64x256xf32> to vector<64x128xf32>
    %12 = vector.shape_cast %11 : vector<64x128xf32> to vector<8x8x128xf32>
    %c0_7 = arith.constant 0 : index
    %c0_8 = arith.constant 0 : index
    %13 = vector.load %arg2[%c0_7, %c0_8] : memref<8x128xbf16, #tpu.memory_space<vmem>>, vector<8x128xbf16>
    %c0_9 = arith.constant 0 : index
    %c0_10 = arith.constant 0 : index
    %14 = vector.load %arg5[%c0_9, %c0_10] : memref<128x128xbf16, #tpu.memory_space<vmem>>, vector<128x128xbf16>
    %cst_11 = arith.constant dense<0.000000e+00> : vector<8x128xf32>
    %15 = tpu.matmul %13, %14, %cst_11 {dimension_numbers = #tpu.dot_dimension_numbers<[1], [0], [0], [1], [0, 0, 1, 1], [], []>} : vector<8x128xbf16>, vector<128x128xbf16>, vector<8x128xf32> -> vector<8x128xf32>
    %c0_12 = arith.constant 0 : index
    %c0_13 = arith.constant 0 : index
    %16 = vector.load %arg6[%c0_12, %c0_13] : memref<1x128xf32, #tpu.memory_space<vmem>>, vector<1x128xf32>
    %17 = vector.broadcast %16 : vector<1x128xf32> to vector<8x128xf32>
    %18 = arith.addf %15, %17 : vector<8x128xf32>
    %19 = vector.extract_strided_slice %10 {offsets = [0, 0, 0], sizes = [8, 8, 32], strides = [1, 1, 1]} : vector<8x8x128xf32> to vector<8x8x32xf32>
    %20 = arith.truncf %19 : vector<8x8x32xf32> to vector<8x8x32xbf16>
    %21 = vector.extract_strided_slice %12 {offsets = [0, 0, 0], sizes = [8, 8, 32], strides = [1, 1, 1]} : vector<8x8x128xf32> to vector<8x8x32xf32>
    %22 = arith.truncf %21 : vector<8x8x32xf32> to vector<8x8x32xbf16>
    "tpu.trace_start"() <{level = 10 : i32, message = "bld,bmd->blm"}> : () -> ()
    %cst_14 = arith.constant dense<0.000000e+00> : vector<8x8x8xf32>
    %23 = tpu.matmul %20, %22, %cst_14 {dimension_numbers = #tpu.dot_dimension_numbers<[2], [2], [1], [1], [0, 0, 0, 1, 1, 1], [0], [0]>} : vector<8x8x32xbf16>, vector<8x8x32xbf16>, vector<8x8x8xf32> -> vector<8x8x8xf32>
    "tpu.trace_stop"() : () -> ()
    %cst_15 = arith.constant dense<0xFF800000> : vector<8x8xf32>
    %24 = vector.multi_reduction <maximumf>, %23, %cst_15 [2] : vector<8x8x8xf32> to vector<8x8xf32>
    %25 = vector.shape_cast %24 : vector<8x8xf32> to vector<8x8x1xf32>
    %26 = vector.broadcast %25 : vector<8x8x1xf32> to vector<8x8x8xf32>
    %27 = arith.subf %23, %26 : vector<8x8x8xf32>
    %28 = math.exp %27 : vector<8x8x8xf32>
    %cst_16 = arith.constant dense<0.000000e+00> : vector<8x8xf32>
    %29 = vector.multi_reduction <add>, %28, %cst_16 [2] : vector<8x8x8xf32> to vector<8x8xf32>
    %30 = vector.shape_cast %29 : vector<8x8xf32> to vector<8x8x1xf32>
    %31 = vector.broadcast %30 : vector<8x8x1xf32> to vector<8x8x8xf32>
    %32 = arith.divf %28, %31 : vector<8x8x8xf32>
    %33 = vector.extract_strided_slice %18 {offsets = [0, 0], sizes = [8, 32], strides = [1, 1]} : vector<8x128xf32> to vector<8x32xf32>
    %34 = arith.truncf %33 : vector<8x32xf32> to vector<8x32xbf16>
    %35 = vector.shape_cast %32 : vector<8x8x8xf32> to vector<64x8xf32>
    %36 = arith.truncf %35 : vector<64x8xf32> to vector<64x8xbf16>
    %cst_17 = arith.constant dense<0.000000e+00> : vector<64x32xf32>
    %37 = tpu.matmul %36, %34, %cst_17 {dimension_numbers = #tpu.dot_dimension_numbers<[1], [0], [0], [1], [0, 0, 1, 1], [], []>} : vector<64x8xbf16>, vector<8x32xbf16>, vector<64x32xf32> -> vector<64x32xf32>
    %38 = vector.shape_cast %37 : vector<64x32xf32> to vector<8x8x32xf32>
    %39 = vector.extract_strided_slice %10 {offsets = [0, 0, 32], sizes = [8, 8, 32], strides = [1, 1, 1]} : vector<8x8x128xf32> to vector<8x8x32xf32>
    %40 = arith.truncf %39 : vector<8x8x32xf32> to vector<8x8x32xbf16>
    %41 = vector.extract_strided_slice %12 {offsets = [0, 0, 32], sizes = [8, 8, 32], strides = [1, 1, 1]} : vector<8x8x128xf32> to vector<8x8x32xf32>
    %42 = arith.truncf %41 : vector<8x8x32xf32> to vector<8x8x32xbf16>
    "tpu.trace_start"() <{level = 10 : i32, message = "bld,bmd->blm"}> : () -> ()
    %cst_18 = arith.constant dense<0.000000e+00> : vector<8x8x8xf32>
    %43 = tpu.matmul %40, %42, %cst_18 {dimension_numbers = #tpu.dot_dimension_numbers<[2], [2], [1], [1], [0, 0, 0, 1, 1, 1], [0], [0]>} : vector<8x8x32xbf16>, vector<8x8x32xbf16>, vector<8x8x8xf32> -> vector<8x8x8xf32>
    "tpu.trace_stop"() : () -> ()
    %cst_19 = arith.constant dense<0xFF800000> : vector<8x8xf32>
    %44 = vector.multi_reduction <maximumf>, %43, %cst_19 [2] : vector<8x8x8xf32> to vector<8x8xf32>
    %45 = vector.shape_cast %44 : vector<8x8xf32> to vector<8x8x1xf32>
    %46 = vector.broadcast %45 : vector<8x8x1xf32> to vector<8x8x8xf32>
    %47 = arith.subf %43, %46 : vector<8x8x8xf32>
    %48 = math.exp %47 : vector<8x8x8xf32>
    %cst_20 = arith.constant dense<0.000000e+00> : vector<8x8xf32>
    %49 = vector.multi_reduction <add>, %48, %cst_20 [2] : vector<8x8x8xf32> to vector<8x8xf32>
    %50 = vector.shape_cast %49 : vector<8x8xf32> to vector<8x8x1xf32>
    %51 = vector.broadcast %50 : vector<8x8x1xf32> to vector<8x8x8xf32>
    %52 = arith.divf %48, %51 : vector<8x8x8xf32>
    %53 = vector.extract_strided_slice %18 {offsets = [0, 32], sizes = [8, 32], strides = [1, 1]} : vector<8x128xf32> to vector<8x32xf32>
    %54 = arith.truncf %53 : vector<8x32xf32> to vector<8x32xbf16>
    %55 = vector.shape_cast %52 : vector<8x8x8xf32> to vector<64x8xf32>
    %56 = arith.truncf %55 : vector<64x8xf32> to vector<64x8xbf16>
    %cst_21 = arith.constant dense<0.000000e+00> : vector<64x32xf32>
    %57 = tpu.matmul %56, %54, %cst_21 {dimension_numbers = #tpu.dot_dimension_numbers<[1], [0], [0], [1], [0, 0, 1, 1], [], []>} : vector<64x8xbf16>, vector<8x32xbf16>, vector<64x32xf32> -> vector<64x32xf32>
    %58 = vector.shape_cast %57 : vector<64x32xf32> to vector<8x8x32xf32>
    %59 = vector.extract_strided_slice %10 {offsets = [0, 0, 64], sizes = [8, 8, 32], strides = [1, 1, 1]} : vector<8x8x128xf32> to vector<8x8x32xf32>
    %60 = arith.truncf %59 : vector<8x8x32xf32> to vector<8x8x32xbf16>
    %61 = vector.extract_strided_slice %12 {offsets = [0, 0, 64], sizes = [8, 8, 32], strides = [1, 1, 1]} : vector<8x8x128xf32> to vector<8x8x32xf32>
    %62 = arith.truncf %61 : vector<8x8x32xf32> to vector<8x8x32xbf16>
    "tpu.trace_start"() <{level = 10 : i32, message = "bld,bmd->blm"}> : () -> ()
    %cst_22 = arith.constant dense<0.000000e+00> : vector<8x8x8xf32>
    %63 = tpu.matmul %60, %62, %cst_22 {dimension_numbers = #tpu.dot_dimension_numbers<[2], [2], [1], [1], [0, 0, 0, 1, 1, 1], [0], [0]>} : vector<8x8x32xbf16>, vector<8x8x32xbf16>, vector<8x8x8xf32> -> vector<8x8x8xf32>
    "tpu.trace_stop"() : () -> ()
    %cst_23 = arith.constant dense<0xFF800000> : vector<8x8xf32>
    %64 = vector.multi_reduction <maximumf>, %63, %cst_23 [2] : vector<8x8x8xf32> to vector<8x8xf32>
    %65 = vector.shape_cast %64 : vector<8x8xf32> to vector<8x8x1xf32>
    %66 = vector.broadcast %65 : vector<8x8x1xf32> to vector<8x8x8xf32>
    %67 = arith.subf %63, %66 : vector<8x8x8xf32>
    %68 = math.exp %67 : vector<8x8x8xf32>
    %cst_24 = arith.constant dense<0.000000e+00> : vector<8x8xf32>
    %69 = vector.multi_reduction <add>, %68, %cst_24 [2] : vector<8x8x8xf32> to vector<8x8xf32>
    %70 = vector.shape_cast %69 : vector<8x8xf32> to vector<8x8x1xf32>
    %71 = vector.broadcast %70 : vector<8x8x1xf32> to vector<8x8x8xf32>
    %72 = arith.divf %68, %71 : vector<8x8x8xf32>
    %73 = vector.extract_strided_slice %18 {offsets = [0, 64], sizes = [8, 32], strides = [1, 1]} : vector<8x128xf32> to vector<8x32xf32>
    %74 = arith.truncf %73 : vector<8x32xf32> to vector<8x32xbf16>
    %75 = vector.shape_cast %72 : vector<8x8x8xf32> to vector<64x8xf32>
    %76 = arith.truncf %75 : vector<64x8xf32> to vector<64x8xbf16>
    %cst_25 = arith.constant dense<0.000000e+00> : vector<64x32xf32>
    %77 = tpu.matmul %76, %74, %cst_25 {dimension_numbers = #tpu.dot_dimension_numbers<[1], [0], [0], [1], [0, 0, 1, 1], [], []>} : vector<64x8xbf16>, vector<8x32xbf16>, vector<64x32xf32> -> vector<64x32xf32>
    %78 = vector.shape_cast %77 : vector<64x32xf32> to vector<8x8x32xf32>
    %79 = vector.extract_strided_slice %10 {offsets = [0, 0, 96], sizes = [8, 8, 32], strides = [1, 1, 1]} : vector<8x8x128xf32> to vector<8x8x32xf32>
    %80 = arith.truncf %79 : vector<8x8x32xf32> to vector<8x8x32xbf16>
    %81 = vector.extract_strided_slice %12 {offsets = [0, 0, 96], sizes = [8, 8, 32], strides = [1, 1, 1]} : vector<8x8x128xf32> to vector<8x8x32xf32>
    %82 = arith.truncf %81 : vector<8x8x32xf32> to vector<8x8x32xbf16>
    "tpu.trace_start"() <{level = 10 : i32, message = "bld,bmd->blm"}> : () -> ()
    %cst_26 = arith.constant dense<0.000000e+00> : vector<8x8x8xf32>
    %83 = tpu.matmul %80, %82, %cst_26 {dimension_numbers = #tpu.dot_dimension_numbers<[2], [2], [1], [1], [0, 0, 0, 1, 1, 1], [0], [0]>} : vector<8x8x32xbf16>, vector<8x8x32xbf16>, vector<8x8x8xf32> -> vector<8x8x8xf32>
    "tpu.trace_stop"() : () -> ()
    %cst_27 = arith.constant dense<0xFF800000> : vector<8x8xf32>
    %84 = vector.multi_reduction <maximumf>, %83, %cst_27 [2] : vector<8x8x8xf32> to vector<8x8xf32>
    %85 = vector.shape_cast %84 : vector<8x8xf32> to vector<8x8x1xf32>
    %86 = vector.broadcast %85 : vector<8x8x1xf32> to vector<8x8x8xf32>
    %87 = arith.subf %83, %86 : vector<8x8x8xf32>
    %88 = math.exp %87 : vector<8x8x8xf32>
    %cst_28 = arith.constant dense<0.000000e+00> : vector<8x8xf32>
    %89 = vector.multi_reduction <add>, %88, %cst_28 [2] : vector<8x8x8xf32> to vector<8x8xf32>
    %90 = vector.shape_cast %89 : vector<8x8xf32> to vector<8x8x1xf32>
    %91 = vector.broadcast %90 : vector<8x8x1xf32> to vector<8x8x8xf32>
    %92 = arith.divf %88, %91 : vector<8x8x8xf32>
    %93 = vector.extract_strided_slice %18 {offsets = [0, 96], sizes = [8, 32], strides = [1, 1]} : vector<8x128xf32> to vector<8x32xf32>
    %94 = arith.truncf %93 : vector<8x32xf32> to vector<8x32xbf16>
    %95 = vector.shape_cast %92 : vector<8x8x8xf32> to vector<64x8xf32>
    %96 = arith.truncf %95 : vector<64x8xf32> to vector<64x8xbf16>
    %cst_29 = arith.constant dense<0.000000e+00> : vector<64x32xf32>
    %97 = tpu.matmul %96, %94, %cst_29 {dimension_numbers = #tpu.dot_dimension_numbers<[1], [0], [0], [1], [0, 0, 1, 1], [], []>} : vector<64x8xbf16>, vector<8x32xbf16>, vector<64x32xf32> -> vector<64x32xf32>
    %98 = vector.shape_cast %97 : vector<64x32xf32> to vector<8x8x32xf32>
    %99 = tpu.concatenate %38, %58, %78, %98 in 2 : vector<8x8x32xf32>, vector<8x8x32xf32>, vector<8x8x32xf32>, vector<8x8x32xf32> -> vector<8x8x128xf32>
    %100 = vector.shape_cast %99 : vector<8x8x128xf32> to vector<64x128xf32>
    %101 = arith.truncf %100 : vector<64x128xf32> to vector<64x128xbf16>
    %c0_30 = arith.constant 0 : index
    %c0_31 = arith.constant 0 : index
    %102 = vector.load %arg7[%c0_30, %c0_31] : memref<128x256xbf16, #tpu.memory_space<vmem>>, vector<128x256xbf16>
    %cst_32 = arith.constant dense<0.000000e+00> : vector<64x256xf32>
    %103 = tpu.matmul %101, %102, %cst_32 {dimension_numbers = #tpu.dot_dimension_numbers<[1], [0], [0], [1], [0, 0, 1, 1], [], []>} : vector<64x128xbf16>, vector<128x256xbf16>, vector<64x256xf32> -> vector<64x256xf32>
    %c0_33 = arith.constant 0 : index
    %c0_34 = arith.constant 0 : index
    %104 = vector.load %arg8[%c0_33, %c0_34] : memref<1x256xf32, #tpu.memory_space<vmem>>, vector<1x256xf32>
    %105 = vector.broadcast %104 : vector<1x256xf32> to vector<64x256xf32>
    %106 = arith.addf %103, %105 : vector<64x256xf32>
    %107 = vector.extract_strided_slice %106 {offsets = [0, 0], sizes = [64, 128], strides = [1, 1]} : vector<64x256xf32> to vector<64x128xf32>
    %108 = vector.shape_cast %107 : vector<64x128xf32> to vector<8x8x128xf32>
    %109 = vector.extract_strided_slice %106 {offsets = [0, 128], sizes = [64, 128], strides = [1, 1]} : vector<64x256xf32> to vector<64x128xf32>
    %110 = vector.shape_cast %109 : vector<64x128xf32> to vector<8x8x128xf32>
    %c0_35 = arith.constant 0 : index
    %c0_36 = arith.constant 0 : index
    %111 = vector.load %arg9[%c0_35, %c0_36] : memref<8x128xf32, #tpu.memory_space<vmem>>, vector<8x128xf32>
    %112 = vector.shape_cast %111 : vector<8x128xf32> to vector<1x8x128xf32>
    %113 = vector.broadcast %112 : vector<1x8x128xf32> to vector<8x8x128xf32>
    %114 = arith.mulf %108, %113 : vector<8x8x128xf32>
    %c0_37 = arith.constant 0 : index
    %c0_38 = arith.constant 0 : index
    %115 = vector.load %arg10[%c0_37, %c0_38] : memref<8x128xf32, #tpu.memory_space<vmem>>, vector<8x128xf32>
    %116 = vector.shape_cast %115 : vector<8x128xf32> to vector<1x8x128xf32>
    %117 = vector.broadcast %116 : vector<1x8x128xf32> to vector<8x8x128xf32>
    %118 = arith.mulf %110, %117 : vector<8x8x128xf32>
    %119 = arith.addf %114, %118 : vector<8x8x128xf32>
    %c0_39 = arith.constant 0 : index
    %c0_40 = arith.constant 0 : index
    %c0_41 = arith.constant 0 : index
    %120 = vector.load %arg11[%c0_39, %c0_40, %c0_41] : memref<8x8x128xf32, #tpu.memory_space<vmem>>, vector<8x8x128xf32>
    tpu.vector_store %arg11[%c0_39, %c0_40, %c0_41], %119 {strides = array<i32>} : memref<8x8x128xf32, #tpu.memory_space<vmem>>, vector<8x8x128xf32>,
    return
  }
  func.func @transform_0(%arg0: i32) -> (i32, i32, i32) {
    %c0_i32 = arith.constant 0 : i32
    %c0_i32_0 = arith.constant 0 : i32
    %c0_i32_1 = arith.constant 0 : i32
    return %arg0, %c0_i32, %c0_i32_0 : i32, i32, i32
  }
  func.func @transform_1(%arg0: i32) -> (i32, i32) {
    %c0_i32 = arith.constant 0 : i32
    %c0_i32_0 = arith.constant 0 : i32
    %c0_i32_1 = arith.constant 0 : i32
    return %c0_i32, %c0_i32_0 : i32, i32
  }
  func.func @transform_2(%arg0: i32) -> (i32, i32) {
    %c0_i32 = arith.constant 0 : i32
    %c0_i32_0 = arith.constant 0 : i32
    %c0_i32_1 = arith.constant 0 : i32
    return %c0_i32, %c0_i32_0 : i32, i32
  }
  func.func @transform_3(%arg0: i32) -> (i32, i32) {
    %c0_i32 = arith.constant 0 : i32
    %c0_i32_0 = arith.constant 0 : i32
    %c0_i32_1 = arith.constant 0 : i32
    return %c0_i32, %c0_i32_0 : i32, i32
  }
  func.func @transform_4(%arg0: i32) -> (i32, i32) {
    %c0_i32 = arith.constant 0 : i32
    %c0_i32_0 = arith.constant 0 : i32
    %c0_i32_1 = arith.constant 0 : i32
    return %c0_i32, %c0_i32_0 : i32, i32
  }
  func.func @transform_5(%arg0: i32) -> (i32, i32) {
    %c0_i32 = arith.constant 0 : i32
    %c0_i32_0 = arith.constant 0 : i32
    %c0_i32_1 = arith.constant 0 : i32
    return %c0_i32, %c0_i32_0 : i32, i32
  }
  func.func @transform_6(%arg0: i32) -> (i32, i32) {
    %c0_i32 = arith.constant 0 : i32
    %c0_i32_0 = arith.constant 0 : i32
    %c0_i32_1 = arith.constant 0 : i32
    return %c0_i32, %c0_i32_0 : i32, i32
  }
  func.func @transform_7(%arg0: i32) -> (i32, i32) {
    %c0_i32 = arith.constant 0 : i32
    %c0_i32_0 = arith.constant 0 : i32
    %c0_i32_1 = arith.constant 0 : i32
    return %c0_i32, %c0_i32_0 : i32, i32
  }
  func.func @transform_8(%arg0: i32) -> (i32, i32) {
    %c0_i32 = arith.constant 0 : i32
    %c0_i32_0 = arith.constant 0 : i32
    %c0_i32_1 = arith.constant 0 : i32
    return %c0_i32, %c0_i32_0 : i32, i32
  }
  func.func @transform_9(%arg0: i32) -> (i32, i32) {
    %c0_i32 = arith.constant 0 : i32
    %c0_i32_0 = arith.constant 0 : i32
    %c0_i32_1 = arith.constant 0 : i32
    return %c0_i32, %c0_i32_0 : i32, i32
  }
  func.func @transform_10(%arg0: i32) -> (i32, i32, i32) {
    %c0_i32 = arith.constant 0 : i32
    %c0_i32_0 = arith.constant 0 : i32
    %c0_i32_1 = arith.constant 0 : i32
    return %arg0, %c0_i32, %c0_i32_0 : i32, i32, i32
  }
}

</mosaic_0001>

<llo_original>
// kernel: coordinate_attention_forward.3
$region0: #{coordinate_attention_forward.3}
  #allocation0 [shape = 'u32[]', space=smem, size = 0x4, offset = 0x4, fixed_abs, tag = 'smem constant byte address 0x4 - core index']
  #allocation1 [shape = 'u32[72,128]{1,0:T(1,128)}', space=vmem, size = 0x9000, scoped, tag = 'internal scratch']
  %s0 = inlined_call_operand.vmem [shape: bf16[16,8,128], index: 0, kind: input, shape index: {}]
  %s1 = inlined_call_operand.vmem [shape: bf16[8,128], index: 1, kind: input, shape index: {}]
  %s2 = inlined_call_operand.vmem [shape: bf16[128,256], index: 2, kind: input, shape index: {}]
  %s3 = inlined_call_operand.vmem [shape: f32[1,256], index: 3, kind: input, shape index: {}, may-alias: {3,7}]
  %s4 = inlined_call_operand.vmem [shape: bf16[128,128], index: 4, kind: input, shape index: {}]
  %s5 = inlined_call_operand.vmem [shape: f32[1,128], index: 5, kind: input, shape index: {}]
  %s6 = inlined_call_operand.vmem [shape: bf16[128,256], index: 6, kind: input, shape index: {}]
  %s7 = inlined_call_operand.vmem [shape: f32[1,256], index: 7, kind: input, shape index: {}, may-alias: {3,7}]
  %s8 = inlined_call_operand.vmem [shape: f32[8,128], index: 8, kind: input, shape index: {}]
  %s9 = inlined_call_operand.vmem [shape: f32[8,128], index: 9, kind: input, shape index: {}]
  %s10 = inlined_call_operand.vmem [shape: f32[16,8,128], index: 10, kind: output, shape index: {}]
  %s11 = sld [smem:[#allocation0]]
  $region73: #{coordinate_attention_forward.3} parent=0
    _
  %s13 = ssub.s32 1, %s11
  %s14 = scalar_select 0, %s13, %s11
  loop: start=0, step=1, limit=4
  $region2: #{coordinate_attention_forward.3} parent=0 // loop_pre_header
    _
  $region3: #{coordinate_attention_forward.3} parent=0 // loop_header
    %s16 = sphi 0, %s20
    %p17 = scmp.ge.s32.totalorder %s16, 4
    %s26 = sphi 0, %s28
    %s29 = sphi 0, %s26
    %s30 = sphi 0, %s29
    %s46 = sphi 0, %s30
    %s50 = sphi 0, %s50
    %s52 = sphi 0, %s50
    %s53 = sphi 0, %s52
    %s67 = sphi 0, %s53
    %s71 = sphi 0, %s71
    %s73 = sphi 0, %s71
    %s74 = sphi 0, %s73
    %s88 = sphi 0, %s74
    %s92 = sphi 0, %s92
    %s94 = sphi 0, %s92
    %s95 = sphi 0, %s94
    %s109 = sphi 0, %s95
    %s113 = sphi 0, %s113
    %s115 = sphi 0, %s113
    %s116 = sphi 0, %s115
    %s130 = sphi 0, %s116
    %s134 = sphi 0, %s134
    %s136 = sphi 0, %s134
    %s137 = sphi 0, %s136
    %s151 = sphi 0, %s137
    %s155 = sphi 0, %s155
    %s157 = sphi 0, %s155
    %s158 = sphi 0, %s157
    %s172 = sphi 0, %s158
    %s176 = sphi 0, %s176
    %s178 = sphi 0, %s176
    %s179 = sphi 0, %s178
    %s193 = sphi 0, %s179
    %s197 = sphi 0, %s197
    %s199 = sphi 0, %s197
    %s200 = sphi 0, %s199
    %s214 = sphi 0, %s200
    %s218 = sphi 0, %s218
    %s220 = sphi 0, %s218
    %s221 = sphi 0, %s220
    %s235 = sphi 0, %s221
    %s241 = sphi 0, %s243
    %s244 = sphi 0, %s241
    %s245 = sphi 0, %s244
    %s261 = sphi 0, %s245
  $region4: #{coordinate_attention_forward.3} parent=0 // loop_header_branch
    %19 = sbr.rel (%p17) target = $region8
  $region5: #{coordinate_attention_forward.3} parent=0 // loop_body
    %s21 = ssub.s32 %s16, 1
    %s22 = ssub.s32 %s16, 2
    %s23 = sadd.s32 %s16, 1
    %s24 = ssub.s32 %s16, %s23
    %p25 = scmp.eq.s32.totalorder %s24, 0
    %s27 = sadd.s32 %s26, 1
    %s28 = scalar_select %p25, %s26, %s27
    %p31 = pneg %p25
    %p32 = scmp.eq.s32.totalorder %s16, 1
    %p33 = por %p31, %p32
    %p34 = scmp.ne.s32.totalorder %s26, %s29
    %p35 = scmp.eq.s32.totalorder %s16, 0
    %p36 = por %p34, %p35
    %p37 = scmp.ne.s32.totalorder %s26, %s29
    %p38 = scmp.eq.s32.totalorder %s21, 1
    %p39 = por %p37, %p38
    %p40 = scmp.ne.s32.totalorder %s29, %s30
    %p41 = scmp.eq.s32.totalorder %s21, 0
    %p42 = por %p40, %p41
    %p43 = scmp.ne.s32.totalorder %s29, %s30
    %p44 = scmp.eq.s32.totalorder %s22, 1
    %p45 = por %p43, %p44
    %p47 = scmp.ne.s32.totalorder %s30, %s46
    %p48 = scmp.eq.s32.totalorder %s22, 0
    %p49 = por %p47, %p48
    %s51 = sadd.s32 %s50, 1
    %p54 = scmp.eq.s32.totalorder %s16, 1
    %p55 = scmp.ne.s32.totalorder %s50, %s52
    %p56 = scmp.eq.s32.totalorder %s16, 0
    %p57 = por %p55, %p56
    %p58 = scmp.ne.s32.totalorder %s50, %s52
    %p59 = scmp.eq.s32.totalorder %s21, 1
    %p60 = por %p58, %p59
    %p61 = scmp.ne.s32.totalorder %s52, %s53
    %p62 = scmp.eq.s32.totalorder %s21, 0
    %p63 = por %p61, %p62
    %p64 = scmp.ne.s32.totalorder %s52, %s53
    %p65 = scmp.eq.s32.totalorder %s22, 1
    %p66 = por %p64, %p65
    %p68 = scmp.ne.s32.totalorder %s53, %s67
    %p69 = scmp.eq.s32.totalorder %s22, 0
    %p70 = por %p68, %p69
    %s72 = sadd.s32 %s71, 1
    %p75 = scmp.eq.s32.totalorder %s16, 1
    %p76 = scmp.ne.s32.totalorder %s71, %s73
    %p77 = scmp.eq.s32.totalorder %s16, 0
    %p78 = por %p76, %p77
    %p79 = scmp.ne.s32.totalorder %s71, %s73
    %p80 = scmp.eq.s32.totalorder %s21, 1
    %p81 = por %p79, %p80
    %p82 = scmp.ne.s32.totalorder %s73, %s74
    %p83 = scmp.eq.s32.totalorder %s21, 0
    %p84 = por %p82, %p83
    %p85 = scmp.ne.s32.totalorder %s73, %s74
    %p86 = scmp.eq.s32.totalorder %s22, 1
    %p87 = por %p85, %p86
    %p89 = scmp.ne.s32.totalorder %s74, %s88
    %p90 = scmp.eq.s32.totalorder %s22, 0
    %p91 = por %p89, %p90
    %s93 = sadd.s32 %s92, 1
    %p96 = scmp.eq.s32.totalorder %s16, 1
    %p97 = scmp.ne.s32.totalorder %s92, %s94
    %p98 = scmp.eq.s32.totalorder %s16, 0
    %p99 = por %p97, %p98
    %p100 = scmp.ne.s32.totalorder %s92, %s94
    %p101 = scmp.eq.s32.totalorder %s21, 1
    %p102 = por %p100, %p101
    %p103 = scmp.ne.s32.totalorder %s94, %s95
    %p104 = scmp.eq.s32.totalorder %s21, 0
    %p105 = por %p103, %p104
    %p106 = scmp.ne.s32.totalorder %s94, %s95
    %p107 = scmp.eq.s32.totalorder %s22, 1
    %p108 = por %p106, %p107
    %p110 = scmp.ne.s32.totalorder %s95, %s109
    %p111 = scmp.eq.s32.totalorder %s22, 0
    %p112 = por %p110, %p111
    %s114 = sadd.s32 %s113, 1
    %p117 = scmp.eq.s32.totalorder %s16, 1
    %p118 = scmp.ne.s32.totalorder %s113, %s115
    %p119 = scmp.eq.s32.totalorder %s16, 0
    %p120 = por %p118, %p119
    %p121 = scmp.ne.s32.totalorder %s113, %s115
    %p122 = scmp.eq.s32.totalorder %s21, 1
    %p123 = por %p121, %p122
    %p124 = scmp.ne.s32.totalorder %s115, %s116
    %p125 = scmp.eq.s32.totalorder %s21, 0
    %p126 = por %p124, %p125
    %p127 = scmp.ne.s32.totalorder %s115, %s116
    %p128 = scmp.eq.s32.totalorder %s22, 1
    %p129 = por %p127, %p128
    %p131 = scmp.ne.s32.totalorder %s116, %s130
    %p132 = scmp.eq.s32.totalorder %s22, 0
    %p133 = por %p131, %p132
    %s135 = sadd.s32 %s134, 1
    %p138 = scmp.eq.s32.totalorder %s16, 1
    %p139 = scmp.ne.s32.totalorder %s134, %s136
    %p140 = scmp.eq.s32.totalorder %s16, 0
    %p141 = por %p139, %p140
    %p142 = scmp.ne.s32.totalorder %s134, %s136
    %p143 = scmp.eq.s32.totalorder %s21, 1
    %p144 = por %p142, %p143
    %p145 = scmp.ne.s32.totalorder %s136, %s137
    %p146 = scmp.eq.s32.totalorder %s21, 0
    %p147 = por %p145, %p146
    %p148 = scmp.ne.s32.totalorder %s136, %s137
    %p149 = scmp.eq.s32.totalorder %s22, 1
    %p150 = por %p148, %p149
    %p152 = scmp.ne.s32.totalorder %s137, %s151
    %p153 = scmp.eq.s32.totalorder %s22, 0
    %p154 = por %p152, %p153
    %s156 = sadd.s32 %s155, 1
    %p159 = scmp.eq.s32.totalorder %s16, 1
    %p160 = scmp.ne.s32.totalorder %s155, %s157
    %p161 = scmp.eq.s32.totalorder %s16, 0
    %p162 = por %p160, %p161
    %p163 = scmp.ne.s32.totalorder %s155, %s157
    %p164 = scmp.eq.s32.totalorder %s21, 1
    %p165 = por %p163, %p164
    %p166 = scmp.ne.s32.totalorder %s157, %s158
    %p167 = scmp.eq.s32.totalorder %s21, 0
    %p168 = por %p166, %p167
    %p169 = scmp.ne.s32.totalorder %s157, %s158
    %p170 = scmp.eq.s32.totalorder %s22, 1
    %p171 = por %p169, %p170
    %p173 = scmp.ne.s32.totalorder %s158, %s172
    %p174 = scmp.eq.s32.totalorder %s22, 0
    %p175 = por %p173, %p174
    %s177 = sadd.s32 %s176, 1
    %p180 = scmp.eq.s32.totalorder %s16, 1
    %p181 = scmp.ne.s32.totalorder %s176, %s178
    %p182 = scmp.eq.s32.totalorder %s16, 0
    %p183 = por %p181, %p182
    %p184 = scmp.ne.s32.totalorder %s176, %s178
    %p185 = scmp.eq.s32.totalorder %s21, 1
    %p186 = por %p184, %p185
    %p187 = scmp.ne.s32.totalorder %s178, %s179
    %p188 = scmp.eq.s32.totalorder %s21, 0
    %p189 = por %p187, %p188
    %p190 = scmp.ne.s32.totalorder %s178, %s179
    %p191 = scmp.eq.s32.totalorder %s22, 1
    %p192 = por %p190, %p191
    %p194 = scmp.ne.s32.totalorder %s179, %s193
    %p195 = scmp.eq.s32.totalorder %s22, 0
    %p196 = por %p194, %p195
    %s198 = sadd.s32 %s197, 1
    %p201 = scmp.eq.s32.totalorder %s16, 1
    %p202 = scmp.ne.s32.totalorder %s197, %s199
    %p203 = scmp.eq.s32.totalorder %s16, 0
    %p204 = por %p202, %p203
    %p205 = scmp.ne.s32.totalorder %s197, %s199
    %p206 = scmp.eq.s32.totalorder %s21, 1
    %p207 = por %p205, %p206
    %p208 = scmp.ne.s32.totalorder %s199, %s200
    %p209 = scmp.eq.s32.totalorder %s21, 0
    %p210 = por %p208, %p209
    %p211 = scmp.ne.s32.totalorder %s199, %s200
    %p212 = scmp.eq.s32.totalorder %s22, 1
    %p213 = por %p211, %p212
    %p215 = scmp.ne.s32.totalorder %s200, %s214
    %p216 = scmp.eq.s32.totalorder %s22, 0
    %p217 = por %p215, %p216
    %s219 = sadd.s32 %s218, 1
    %p222 = scmp.eq.s32.totalorder %s16, 1
    %p223 = scmp.ne.s32.totalorder %s218, %s220
    %p224 = scmp.eq.s32.totalorder %s16, 0
    %p225 = por %p223, %p224
    %p226 = scmp.ne.s32.totalorder %s218, %s220
    %p227 = scmp.eq.s32.totalorder %s21, 1
    %p228 = por %p226, %p227
    %p229 = scmp.ne.s32.totalorder %s220, %s221
    %p230 = scmp.eq.s32.totalorder %s21, 0
    %p231 = por %p229, %p230
    %p232 = scmp.ne.s32.totalorder %s220, %s221
    %p233 = scmp.eq.s32.totalorder %s22, 1
    %p234 = por %p232, %p233
    %p236 = scmp.ne.s32.totalorder %s221, %s235
    %p237 = scmp.eq.s32.totalorder %s22, 0
    %p238 = por %p236, %p237
    %s239 = ssub.s32 %s16, %s23
    %p240 = scmp.eq.s32.totalorder %s239, 0
    %s242 = sadd.s32 %s241, 1
    %s243 = scalar_select %p240, %s241, %s242
    %p246 = pneg %p240
    %p247 = scmp.eq.s32.totalorder %s16, 1
    %p248 = por %p246, %p247
    %p249 = scmp.ne.s32.totalorder %s241, %s244
    %p250 = scmp.eq.s32.totalorder %s16, 0
    %p251 = por %p249, %p250
    %p252 = scmp.ne.s32.totalorder %s241, %s244
    %p253 = scmp.eq.s32.totalorder %s21, 1
    %p254 = por %p252, %p253
    %p255 = scmp.ne.s32.totalorder %s244, %s245
    %p256 = scmp.eq.s32.totalorder %s21, 0
    %p257 = por %p255, %p256
    %p258 = scmp.ne.s32.totalorder %s244, %s245
    %p259 = scmp.eq.s32.totalorder %s22, 1
    %p260 = por %p258, %p259
    %p262 = scmp.ne.s32.totalorder %s245, %s261
    %p263 = scmp.eq.s32.totalorder %s22, 0
    %p264 = por %p262, %p263
    %p265 = scmp.le.s32.totalorder 1, %s16
    %p266 = scmp.lt.s32.totalorder %s16, 3
    %p267 = pnand %p265, %p266
    %p268 = pneg %p267
    // Predicated region
    $region9: #{coordinate_attention_forward.3} parent=5 // pred_check
      _
    $region10: #{coordinate_attention_forward.3} parent=5 // pred_check_branch
      %270 = sbr.rel (%p267) target = $region12
    $region11: #{coordinate_attention_forward.3} parent=5 // pred_region
      %s271 = ssub.s32 %s16, 1
      // Predicated region
      $region13: #{coordinate_attention_forward.3} parent=11 // pred_check
        %p272 = pneg %p63
      $region14: #{coordinate_attention_forward.3} parent=11 // pred_check_branch
        %274 = sbr.rel (%p272) target = $region16
      $region15: #{coordinate_attention_forward.3} parent=11 // pred_region
        _
      $region16: #{coordinate_attention_forward.3} parent=11 // pred_fallthru
        _
      // Predicated region
      $region17: #{coordinate_attention_forward.3} parent=11 // pred_check
        %p275 = pneg %p84
      $region18: #{coordinate_attention_forward.3} parent=11 // pred_check_branch
        %277 = sbr.rel (%p275) target = $region20
      $region19: #{coordinate_attention_forward.3} parent=11 // pred_region
        _
      $region20: #{coordinate_attention_forward.3} parent=11 // pred_fallthru
        _
      // Predicated region
      $region21: #{coordinate_attention_forward.3} parent=11 // pred_check
        %p278 = pneg %p105
      $region22: #{coordinate_attention_forward.3} parent=11 // pred_check_branch
        %280 = sbr.rel (%p278) target = $region24
      $region23: #{coordinate_attention_forward.3} parent=11 // pred_region
        _
      $region24: #{coordinate_attention_forward.3} parent=11 // pred_fallthru
        _
      // Predicated region
      $region25: #{coordinate_attention_forward.3} parent=11 // pred_check
        %p281 = pneg %p126
      $region26: #{coordinate_attention_forward.3} parent=11 // pred_check_branch
        %283 = sbr.rel (%p281) target = $region28
      $region27: #{coordinate_attention_forward.3} parent=11 // pred_region
        _
      $region28: #{coordinate_attention_forward.3} parent=11 // pred_fallthru
        _
      // Predicated region
      $region29: #{coordinate_attention_forward.3} parent=11 // pred_check
        %p284 = pneg %p147
      $region30: #{coordinate_attention_forward.3} parent=11 // pred_check_branch
        %286 = sbr.rel (%p284) target = $region32
      $region31: #{coordinate_attention_forward.3} parent=11 // pred_region
        _
      $region32: #{coordinate_attention_forward.3} parent=11 // pred_fallthru
        _
      // Predicated region
      $region33: #{coordinate_attention_forward.3} parent=11 // pred_check
        %p287 = pneg %p168
      $region34: #{coordinate_attention_forward.3} parent=11 // pred_check_branch
        %289 = sbr.rel (%p287) target = $region36
      $region35: #{coordinate_attention_forward.3} parent=11 // pred_region
        _
      $region36: #{coordinate_attention_forward.3} parent=11 // pred_fallthru
        _
      // Predicated region
      $region37: #{coordinate_attention_forward.3} parent=11 // pred_check
        %p290 = pneg %p189
      $region38: #{coordinate_attention_forward.3} parent=11 // pred_check_branch
        %292 = sbr.rel (%p290) target = $region40
      $region39: #{coordinate_attention_forward.3} parent=11 // pred_region
        _
      $region40: #{coordinate_attention_forward.3} parent=11 // pred_fallthru
        _
      // Predicated region
      $region41: #{coordinate_attention_forward.3} parent=11 // pred_check
        %p293 = pneg %p210
      $region42: #{coordinate_attention_forward.3} parent=11 // pred_check_branch
        %295 = sbr.rel (%p293) target = $region44
      $region43: #{coordinate_attention_forward.3} parent=11 // pred_region
        _
      $region44: #{coordinate_attention_forward.3} parent=11 // pred_fallthru
        _
      // Predicated region
      $region45: #{coordinate_attention_forward.3} parent=11 // pred_check
        %p296 = pneg %p231
      $region46: #{coordinate_attention_forward.3} parent=11 // pred_check_branch
        %298 = sbr.rel (%p296) target = $region48
      $region47: #{coordinate_attention_forward.3} parent=11 // pred_region
        _
      $region48: #{coordinate_attention_forward.3} parent=11 // pred_fallthru
        _
    $region12: #{coordinate_attention_forward.3} parent=5 // pred_fallthru
      _
    %p299 = scmp.lt.s32.totalorder %s16, 2
    // Predicated region
    $region49: #{coordinate_attention_forward.3} parent=5 // pred_check
      %p300 = pneg %p299
    $region50: #{coordinate_attention_forward.3} parent=5 // pred_check_branch
      %302 = sbr.rel (%p300) target = $region52
    $region51: #{coordinate_attention_forward.3} parent=5 // pred_region
      // Predicated region
      $region53: #{coordinate_attention_forward.3} parent=51 // pred_check
        %p303 = pneg %p36
      $region54: #{coordinate_attention_forward.3} parent=51 // pred_check_branch
        %305 = sbr.rel (%p303) target = $region56
      $region55: #{coordinate_attention_forward.3} parent=51 // pred_region
        %s306 = smul.u32 8, %s16
        %p307 = scmp.lt.s32.totalorder %s306, 15
        %s308 = scalar_select %p307, %s306, 15
        %s309 = smul.addr %s308, 4
        %s310 = scalar_lea.vmem %s0, %s309
        %s311 = smul.u32 8, %s16
      $region56: #{coordinate_attention_forward.3} parent=51 // pred_fallthru
        _
    $region52: #{coordinate_attention_forward.3} parent=5 // pred_fallthru
      _
    %p312 = scmp.le.s32.totalorder 1, %s16
    %p313 = scmp.lt.s32.totalorder %s16, 3
    %p314 = pnand %p312, %p313
    %p315 = pneg %p314
    // Predicated region
    $region57: #{coordinate_attention_forward.3} parent=5 // pred_check
      _
    $region58: #{coordinate_attention_forward.3} parent=5 // pred_check_branch
      %317 = sbr.rel (%p314) target = $region60
    $region59: #{coordinate_attention_forward.3} parent=5 // pred_region
      %s318 = ssub.s32 %s16, 1
      %s319 = smul.u32 8, %s21
      %p320 = scmp.lt.s32.totalorder %s319, 15
      %s321 = scalar_select %p320, %s319, 15
      %s322 = smul.addr %s321, 4
      %s323 = scalar_lea.vmem %s0, %s322
      %p324 = pneg %p42
      %p325 = pneg %p39
      %p326 = pneg %p63
      %p327 = pneg %p60
      %p328 = pneg %p84
      %p329 = pneg %p81
      %p330 = pneg %p105
      %p331 = pneg %p102
      %p332 = pneg %p126
      %p333 = pneg %p123
      %p334 = pneg %p147
      %p335 = pneg %p144
      %p336 = pneg %p168
      %p337 = pneg %p165
      %p338 = pneg %p189
      %p339 = pneg %p186
      %p340 = pneg %p210
      %p341 = pneg %p207
      %p342 = pneg %p231
      %p343 = pneg %p228
      %p344 = pneg %p257
      %p345 = pneg %p254
      %s346 = smul.u32 8, %s21
      %p347 = scmp.lt.s32.totalorder %s346, 15
      %s348 = scalar_select %p347, %s346, 15
      %s349 = smul.addr %s348, 8
      %s350 = scalar_lea.vmem %s10, %s349
      %s351 = smul.u32 8, %s21
      %p352 = scmp.lt.s32.totalorder %s351, 15
      %s353 = scalar_select %p352, %s351, 15
      %s354 = smul.addr %s353, 4
      %s355 = scalar_lea.vmem %s0, %s354
      %s356 = smul.u32 8, %s21
      %s357 = smul.u32 8, %s21
      %p358 = scmp.lt.s32.totalorder %s357, 15
      %s359 = scalar_select %p358, %s357, 15
      %s360 = smul.addr %s359, 8
      %s361 = scalar_lea.vmem %s10, %s360
      %s362 = smul.u32 8, %s21
      %v364 = vld [vmem:[%s355] sm:$0xf]
      %v365 = vld [vmem:[%s355 + $0x4] sm:$0xf]
      %v366 = vld [vmem:[%s355 + $0x8] sm:$0xf]
      %v367 = vld [vmem:[%s355 + $0xc] sm:$0xf]
      %v368 = vld [vmem:[%s355 + $0x10] sm:$0xf]
      %v369 = vld [vmem:[%s355 + $0x14] sm:$0xf]
      %v370 = vld [vmem:[%s355 + $0x18] sm:$0xf]
      %v371 = vld [vmem:[%s355 + $0x1c] sm:$0xf]
      %v372 = vld [vmem:[%s2] sm:$0xff]
      %v373 = vld [vmem:[%s2 + $0x8] sm:$0xff]
      %v374 = vld [vmem:[%s2 + $0x10] sm:$0xff]
      %v375 = vld [vmem:[%s2 + $0x18] sm:$0xff]
      %v376 = vld [vmem:[%s2 + $0x20] sm:$0xff]
      %v377 = vld [vmem:[%s2 + $0x28] sm:$0xff]
      %v378 = vld [vmem:[%s2 + $0x30] sm:$0xff]
      %v379 = vld [vmem:[%s2 + $0x38] sm:$0xff]
      %v380 = vld [vmem:[%s2 + $0x40] sm:$0xff]
      %v381 = vld [vmem:[%s2 + $0x48] sm:$0xff]
      %v382 = vld [vmem:[%s2 + $0x50] sm:$0xff]
      %v383 = vld [vmem:[%s2 + $0x58] sm:$0xff]
      %v384 = vld [vmem:[%s2 + $0x60] sm:$0xff]
      %v385 = vld [vmem:[%s2 + $0x68] sm:$0xff]
      %v386 = vld [vmem:[%s2 + $0x70] sm:$0xff]
      %v387 = vld [vmem:[%s2 + $0x78] sm:$0xff]
      %v388 = vld [vmem:[%s3] sm:$0x3]
      %v390 = vperm.slane %v388, 0
      %v391 = vperm.slane %v388, 1
      %v402 = vunpack.c.l.b16 %v364
      %v403 = vunpack.c.l.b16 %v365
      %v404 = vunpack.c.l.b16 %v366
      %v405 = vunpack.c.l.b16 %v367
      %v406 = vunpack.c.l.b16 %v368
      %v407 = vunpack.c.l.b16 %v369
      %v408 = vunpack.c.l.b16 %v370
      %v409 = vunpack.c.l.b16 %v371
      %v410 = vpack.c.b16 %v403, %v402
      %v411 = vpack.c.b16 %v405, %v404
      %v412 = vpack.c.b16 %v407, %v406
      %v413 = vpack.c.b16 %v409, %v408
      %v434 = vunpack.c.l.b16 %v372
      %v435 = vunpack.c.h.b16 %v372
      %v436 = vunpack.c.l.b16 %v373
      %v437 = vunpack.c.h.b16 %v373
      %v438 = vunpack.c.l.b16 %v374
      %v439 = vunpack.c.h.b16 %v374
      %v440 = vunpack.c.l.b16 %v375
      %v441 = vunpack.c.h.b16 %v375
      %v442 = vunpack.c.l.b16 %v376
      %v443 = vunpack.c.h.b16 %v376
      %v444 = vunpack.c.l.b16 %v377
      %v445 = vunpack.c.h.b16 %v377
      %v446 = vunpack.c.l.b16 %v378
      %v447 = vunpack.c.h.b16 %v378
      %v448 = vunpack.c.l.b16 %v379
      %v449 = vunpack.c.h.b16 %v379
      %v450 = vunpack.c.l.b16 %v380
      %v451 = vunpack.c.h.b16 %v380
      %v452 = vunpack.c.l.b16 %v381
      %v453 = vunpack.c.h.b16 %v381
      %v454 = vunpack.c.l.b16 %v382
      %v455 = vunpack.c.h.b16 %v382
      %v456 = vunpack.c.l.b16 %v383
      %v457 = vunpack.c.h.b16 %v383
      %v458 = vunpack.c.l.b16 %v384
      %v459 = vunpack.c.h.b16 %v384
      %v460 = vunpack.c.l.b16 %v385
      %v461 = vunpack.c.h.b16 %v385
      %v462 = vunpack.c.l.b16 %v386
      %v463 = vunpack.c.h.b16 %v386
      %v464 = vunpack.c.l.b16 %v387
      %v465 = vunpack.c.h.b16 %v387
      %v466 = vpack.c.b16 %v436, %v434
      %v467 = vpack.c.b16 %v437, %v435
      %v468 = vpack.c.b16 %v440, %v438
      %v469 = vpack.c.b16 %v441, %v439
      %v470 = vpack.c.b16 %v444, %v442
      %v471 = vpack.c.b16 %v445, %v443
      %v472 = vpack.c.b16 %v448, %v446
      %v473 = vpack.c.b16 %v449, %v447
      %v474 = vpack.c.b16 %v452, %v450
      %v475 = vpack.c.b16 %v453, %v451
      %v476 = vpack.c.b16 %v456, %v454
      %v477 = vpack.c.b16 %v457, %v455
      %v478 = vpack.c.b16 %v460, %v458
      %v479 = vpack.c.b16 %v461, %v459
      %v480 = vpack.c.b16 %v464, %v462
      %v481 = vpack.c.b16 %v465, %v463
      %498 = vmatpush.bf16.msra.mxu0 %v480
      %499 = vmatpush.bf16.msra.mxu0 %v478
      %500 = vmatpush.bf16.msra.mxu0 %v476
      %501 = vmatpush.bf16.msra.mxu0 %v474
      %502 = vmatpush.bf16.msra.mxu0 %v472
      %503 = vmatpush.bf16.msra.mxu0 %v470
      %504 = vmatpush.bf16.msra.mxu0 %v468
      %505 = vmatpush.bf16.msra.mxu0 %v466
      %506 = vmatmul.bf16.gmra.mxu0 %v410
      %v507 = vpop.f32.mrf.mxu0
      %v508 = vadd.f32 %v390, %v507
      %v509 = vpop.f32.mrf.mxu0
      %v510 = vadd.f32 %v390, %v509
      %511 = vmatmul.bf16.gmra.mxu0 %v411
      %v512 = vpop.f32.mrf.mxu0
      %v513 = vadd.f32 %v390, %v512
      %v514 = vpop.f32.mrf.mxu0
      %v515 = vadd.f32 %v390, %v514
      %516 = vmatmul.bf16.gmra.mxu0 %v412
      %v517 = vpop.f32.mrf.mxu0
      %v518 = vadd.f32 %v390, %v517
      %v519 = vpop.f32.mrf.mxu0
      %v520 = vadd.f32 %v390, %v519
      %521 = vmatmul.bf16.gmra.mxu0 %v413
      %v522 = vpop.f32.mrf.mxu0
      %v523 = vadd.f32 %v390, %v522
      %v524 = vpop.f32.mrf.mxu0
      %v525 = vadd.f32 %v390, %v524
      %526 = vdwg.mxu0
      %527 = vmatpush.bf16.msra.mxu0 %v481
      %528 = vmatpush.bf16.msra.mxu0 %v479
      %529 = vmatpush.bf16.msra.mxu0 %v477
      %530 = vmatpush.bf16.msra.mxu0 %v475
      %531 = vmatpush.bf16.msra.mxu0 %v473
      %532 = vmatpush.bf16.msra.mxu0 %v471
      %533 = vmatpush.bf16.msra.mxu0 %v469
      %534 = vmatpush.bf16.msra.mxu0 %v467
      %535 = vmatmul.bf16.gmra.mxu0 %v410
      %v536 = vpop.f32.mrf.mxu0
      %v537 = vadd.f32 %v391, %v536
      %v538 = vpop.f32.mrf.mxu0
      %v539 = vadd.f32 %v391, %v538
      %540 = vmatmul.bf16.gmra.mxu0 %v411
      %v541 = vpop.f32.mrf.mxu0
      %v542 = vadd.f32 %v391, %v541
      %v543 = vpop.f32.mrf.mxu0
      %v544 = vadd.f32 %v391, %v543
      %545 = vmatmul.bf16.gmra.mxu0 %v412
      %v546 = vpop.f32.mrf.mxu0
      %v547 = vadd.f32 %v391, %v546
      %v548 = vpop.f32.mrf.mxu0
      %v549 = vadd.f32 %v391, %v548
      %550 = vmatmul.bf16.gmra.mxu0 %v413
      %v551 = vpop.f32.mrf.mxu0
      %v552 = vadd.f32 %v391, %v551
      %v553 = vpop.f32.mrf.mxu0
      %v554 = vadd.f32 %v391, %v553
      %555 = vdwg.mxu0
      %v556 = vmul.f32 %v508, 0.17677669
      %v557 = vmul.f32 %v510, 0.17677669
      %v558 = vmul.f32 %v513, 0.17677669
      %v559 = vmul.f32 %v515, 0.17677669
      %v560 = vmul.f32 %v518, 0.17677669
      %v561 = vmul.f32 %v520, 0.17677669
      %v562 = vmul.f32 %v523, 0.17677669
      %v563 = vmul.f32 %v525, 0.17677669
      %v564 = vld [vmem:[%s1] sm:$0xf]
      %v565 = vld [vmem:[%s4] sm:$0xf]
      %v566 = vld [vmem:[%s4 + $0x4] sm:$0xf]
      %v567 = vld [vmem:[%s4 + $0x8] sm:$0xf]
      %v568 = vld [vmem:[%s4 + $0xc] sm:$0xf]
      %v569 = vld [vmem:[%s4 + $0x10] sm:$0xf]
      %v570 = vld [vmem:[%s4 + $0x14] sm:$0xf]
      %v571 = vld [vmem:[%s4 + $0x18] sm:$0xf]
      %v572 = vld [vmem:[%s4 + $0x1c] sm:$0xf]
      %v573 = vld [vmem:[%s4 + $0x20] sm:$0xf]
      %v574 = vld [vmem:[%s4 + $0x24] sm:$0xf]
      %v575 = vld [vmem:[%s4 + $0x28] sm:$0xf]
      %v576 = vld [vmem:[%s4 + $0x2c] sm:$0xf]
      %v577 = vld [vmem:[%s4 + $0x30] sm:$0xf]
      %v578 = vld [vmem:[%s4 + $0x34] sm:$0xf]
      %v579 = vld [vmem:[%s4 + $0x38] sm:$0xf]
      %v580 = vld [vmem:[%s4 + $0x3c] sm:$0xf]
      %v581 = vld [vmem:[%s5] sm:$0x1]
      %v583 = vperm.slane %v581, 0
      %v601 = vunpack.c.l.b16 %v565
      %v602 = vunpack.c.l.b16 %v566
      %v603 = vunpack.c.l.b16 %v567
      %v604 = vunpack.c.l.b16 %v568
      %v605 = vunpack.c.l.b16 %v569
      %v606 = vunpack.c.l.b16 %v570
      %v607 = vunpack.c.l.b16 %v571
      %v608 = vunpack.c.l.b16 %v572
      %v609 = vunpack.c.l.b16 %v573
      %v610 = vunpack.c.l.b16 %v574
      %v611 = vunpack.c.l.b16 %v575
      %v612 = vunpack.c.l.b16 %v576
      %v613 = vunpack.c.l.b16 %v577
      %v614 = vunpack.c.l.b16 %v578
      %v615 = vunpack.c.l.b16 %v579
      %v616 = vunpack.c.l.b16 %v580
      %v617 = vpack.c.b16 %v602, %v601
      %v618 = vpack.c.b16 %v604, %v603
      %v619 = vpack.c.b16 %v606, %v605
      %v620 = vpack.c.b16 %v608, %v607
      %v621 = vpack.c.b16 %v610, %v609
      %v622 = vpack.c.b16 %v612, %v611
      %v623 = vpack.c.b16 %v614, %v613
      %v624 = vpack.c.b16 %v616, %v615
      %633 = vmatpush.bf16.msra.mxu0 %v624
      %634 = vmatpush.bf16.msra.mxu0 %v623
      %635 = vmatpush.bf16.msra.mxu0 %v622
      %636 = vmatpush.bf16.msra.mxu0 %v621
      %637 = vmatpush.bf16.msra.mxu0 %v620
      %638 = vmatpush.bf16.msra.mxu0 %v619
      %639 = vmatpush.bf16.msra.mxu0 %v618
      %640 = vmatpush.bf16.msra.mxu0 %v617
      %641 = vmatmul.bf16.gmra.mxu0 %v564
      %v642 = vpop.f32.mrf.mxu0
      %v643 = vadd.f32 %v583, %v642
      %v644 = vpop.f32.mrf.mxu0
      %645 = vdwg.mxu0
      %v646 = vpack.c.bf16 %v556, %v556
      %v647 = vpack.c.bf16 %v557, %v557
      %v648 = vpack.c.bf16 %v558, %v558
      %v649 = vpack.c.bf16 %v559, %v559
      %v650 = vpack.c.bf16 %v560, %v560
      %v651 = vpack.c.bf16 %v561, %v561
      %v652 = vpack.c.bf16 %v562, %v562
      %v653 = vpack.c.bf16 %v563, %v563
      %v654 = vpack.c.bf16 %v537, %v537
      %v655 = vpack.c.bf16 %v539, %v539
      %v656 = vpack.c.bf16 %v542, %v542
      %v657 = vpack.c.bf16 %v544, %v544
      %v658 = vpack.c.bf16 %v547, %v547
      %v659 = vpack.c.bf16 %v549, %v549
      %v660 = vpack.c.bf16 %v552, %v552
      %v661 = vpack.c.bf16 %v554, %v554
      %vm662 = vcmask 261120
      %v664 = vsel %vm662, %v646, 0
      %v667 = vsel %vm662, %v654, 0
      %669 = vmatpush.bf16.xpose.msra.mxu0 0
      %670 = vmatpush.bf16.xpose.msra.mxu0 0
      %671 = vmatpush.bf16.xpose.msra.mxu0 0
      %672 = vmatpush.bf16.xpose.msra.mxu0 0
      %673 = vmatpush.bf16.xpose.msra.mxu0 0
      %674 = vmatpush.bf16.xpose.msra.mxu0 0
      %675 = vmatpush.bf16.xpose.msra.mxu0 0
      %676 = vmatpush.bf16.xpose.msra.mxu0 %v667
      %677 = vmatmul.bf16.gmra.mxu0 %v664
      %v678 = vpop.f32.mrf.mxu0
      %v679 = vadd.f32 0.0, %v678
      %v680 = vpop.f32.mrf.mxu0
      %681 = vdwg.mxu0
      %v683 = vsel %vm662, %v647, 0
      %v686 = vsel %vm662, %v655, 0
      %688 = vmatpush.bf16.xpose.msra.mxu0 0
      %689 = vmatpush.bf16.xpose.msra.mxu0 0
      %690 = vmatpush.bf16.xpose.msra.mxu0 0
      %691 = vmatpush.bf16.xpose.msra.mxu0 0
      %692 = vmatpush.bf16.xpose.msra.mxu0 0
      %693 = vmatpush.bf16.xpose.msra.mxu0 0
      %694 = vmatpush.bf16.xpose.msra.mxu0 0
      %695 = vmatpush.bf16.xpose.msra.mxu0 %v686
      %696 = vmatmul.bf16.gmra.mxu0 %v683
      %v697 = vpop.f32.mrf.mxu0
      %v698 = vadd.f32 0.0, %v697
      %v699 = vpop.f32.mrf.mxu0
      %700 = vdwg.mxu0
      %v702 = vsel %vm662, %v648, 0
      %v705 = vsel %vm662, %v656, 0
      %707 = vmatpush.bf16.xpose.msra.mxu0 0
      %708 = vmatpush.bf16.xpose.msra.mxu0 0
      %709 = vmatpush.bf16.xpose.msra.mxu0 0
      %710 = vmatpush.bf16.xpose.msra.mxu0 0
      %711 = vmatpush.bf16.xpose.msra.mxu0 0
      %712 = vmatpush.bf16.xpose.msra.mxu0 0
      %713 = vmatpush.bf16.xpose.msra.mxu0 0
      %714 = vmatpush.bf16.xpose.msra.mxu0 %v705
      %715 = vmatmul.bf16.gmra.mxu0 %v702
      %v716 = vpop.f32.mrf.mxu0
      %v717 = vadd.f32 0.0, %v716
      %v718 = vpop.f32.mrf.mxu0
      %719 = vdwg.mxu0
      %v721 = vsel %vm662, %v649, 0
      %v724 = vsel %vm662, %v657, 0
      %726 = vmatpush.bf16.xpose.msra.mxu0 0
      %727 = vmatpush.bf16.xpose.msra.mxu0 0
      %728 = vmatpush.bf16.xpose.msra.mxu0 0
      %729 = vmatpush.bf16.xpose.msra.mxu0 0
      %730 = vmatpush.bf16.xpose.msra.mxu0 0
      %731 = vmatpush.bf16.xpose.msra.mxu0 0
      %732 = vmatpush.bf16.xpose.msra.mxu0 0
      %733 = vmatpush.bf16.xpose.msra.mxu0 %v724
      %734 = vmatmul.bf16.gmra.mxu0 %v721
      %v735 = vpop.f32.mrf.mxu0
      %v736 = vadd.f32 0.0, %v735
      %v737 = vpop.f32.mrf.mxu0
      %738 = vdwg.mxu0
      %v740 = vsel %vm662, %v650, 0
      %v743 = vsel %vm662, %v658, 0
      %745 = vmatpush.bf16.xpose.msra.mxu0 0
      %746 = vmatpush.bf16.xpose.msra.mxu0 0
      %747 = vmatpush.bf16.xpose.msra.mxu0 0
      %748 = vmatpush.bf16.xpose.msra.mxu0 0
      %749 = vmatpush.bf16.xpose.msra.mxu0 0
      %750 = vmatpush.bf16.xpose.msra.mxu0 0
      %751 = vmatpush.bf16.xpose.msra.mxu0 0
      %752 = vmatpush.bf16.xpose.msra.mxu0 %v743
      %753 = vmatmul.bf16.gmra.mxu0 %v740
      %v754 = vpop.f32.mrf.mxu0
      %v755 = vadd.f32 0.0, %v754
      %v756 = vpop.f32.mrf.mxu0
      %757 = vdwg.mxu0
      %v759 = vsel %vm662, %v651, 0
      %v762 = vsel %vm662, %v659, 0
      %764 = vmatpush.bf16.xpose.msra.mxu0 0
      %765 = vmatpush.bf16.xpose.msra.mxu0 0
      %766 = vmatpush.bf16.xpose.msra.mxu0 0
      %767 = vmatpush.bf16.xpose.msra.mxu0 0
      %768 = vmatpush.bf16.xpose.msra.mxu0 0
      %769 = vmatpush.bf16.xpose.msra.mxu0 0
      %770 = vmatpush.bf16.xpose.msra.mxu0 0
      %771 = vmatpush.bf16.xpose.msra.mxu0 %v762
      %772 = vmatmul.bf16.gmra.mxu0 %v759
      %v773 = vpop.f32.mrf.mxu0
      %v774 = vadd.f32 0.0, %v773
      %v775 = vpop.f32.mrf.mxu0
      %776 = vdwg.mxu0
      %v778 = vsel %vm662, %v652, 0
      %v781 = vsel %vm662, %v660, 0
      %783 = vmatpush.bf16.xpose.msra.mxu0 0
      %784 = vmatpush.bf16.xpose.msra.mxu0 0
      %785 = vmatpush.bf16.xpose.msra.mxu0 0
      %786 = vmatpush.bf16.xpose.msra.mxu0 0
      %787 = vmatpush.bf16.xpose.msra.mxu0 0
      %788 = vmatpush.bf16.xpose.msra.mxu0 0
      %789 = vmatpush.bf16.xpose.msra.mxu0 0
      %790 = vmatpush.bf16.xpose.msra.mxu0 %v781
      %791 = vmatmul.bf16.gmra.mxu0 %v778
      %v792 = vpop.f32.mrf.mxu0
      %v793 = vadd.f32 0.0, %v792
      %v794 = vpop.f32.mrf.mxu0
      %795 = vdwg.mxu0
      %v797 = vsel %vm662, %v653, 0
      %v800 = vsel %vm662, %v661, 0
      %802 = vmatpush.bf16.xpose.msra.mxu0 0
      %803 = vmatpush.bf16.xpose.msra.mxu0 0
      %804 = vmatpush.bf16.xpose.msra.mxu0 0
      %805 = vmatpush.bf16.xpose.msra.mxu0 0
      %806 = vmatpush.bf16.xpose.msra.mxu0 0
      %807 = vmatpush.bf16.xpose.msra.mxu0 0
      %808 = vmatpush.bf16.xpose.msra.mxu0 0
      %809 = vmatpush.bf16.xpose.msra.mxu0 %v800
      %810 = vmatmul.bf16.gmra.mxu0 %v797
      %v811 = vpop.f32.mrf.mxu0
      %v812 = vadd.f32 0.0, %v811
      %v813 = vpop.f32.mrf.mxu0
      %814 = vdwg.mxu0
      %vm815 = vcmask 64512
      %v816 = vsel %vm815, %v679, -inf
      %817 = vmax.xlane.f32.xlu0 %v816
      %v818 = vpop.xlane.xlu0 %817
      %v819 = vsel %vm815, %v698, -inf
      %820 = vmax.xlane.f32.xlu0 %v819
      %v821 = vpop.xlane.xlu0 %820
      %v822 = vsel %vm815, %v717, -inf
      %823 = vmax.xlane.f32.xlu0 %v822
      %v824 = vpop.xlane.xlu0 %823
      %v825 = vsel %vm815, %v736, -inf
      %826 = vmax.xlane.f32.xlu0 %v825
      %v827 = vpop.xlane.xlu0 %826
      %v828 = vsel %vm815, %v755, -inf
      %829 = vmax.xlane.f32.xlu0 %v828
      %v830 = vpop.xlane.xlu0 %829
      %v831 = vsel %vm815, %v774, -inf
      %832 = vmax.xlane.f32.xlu0 %v831
      %v833 = vpop.xlane.xlu0 %832
      %v834 = vsel %vm815, %v793, -inf
      %835 = vmax.xlane.f32.xlu0 %v834
      %v836 = vpop.xlane.xlu0 %835
      %v837 = vsel %vm815, %v812, -inf
      %838 = vmax.xlane.f32.xlu0 %v837
      %v839 = vpop.xlane.xlu0 %838
      %v840 = vsub.f32 %v679, %v818
      %v841 = vsub.f32 %v698, %v821
      %v842 = vsub.f32 %v717, %v824
      %v843 = vsub.f32 %v736, %v827
      %v844 = vsub.f32 %v755, %v830
      %v845 = vsub.f32 %v774, %v833
      %v846 = vsub.f32 %v793, %v836
      %v847 = vsub.f32 %v812, %v839
      %v848 = vmul.f32 %v840, 1.442695
      %v849 = vpow.pop %v848
      %v850 = vmul.f32 %v841, 1.442695
      %v851 = vpow.pop %v850
      %v852 = vmul.f32 %v842, 1.442695
      %v853 = vpow.pop %v852
      %v854 = vmul.f32 %v843, 1.442695
      %v855 = vpow.pop %v854
      %v856 = vmul.f32 %v844, 1.442695
      %v857 = vpow.pop %v856
      %v858 = vmul.f32 %v845, 1.442695
      %v859 = vpow.pop %v858
      %v860 = vmul.f32 %v846, 1.442695
      %v861 = vpow.pop %v860
      %v862 = vmul.f32 %v847, 1.442695
      %v863 = vpow.pop %v862
      %v864 = vsel %vm815, %v849, 0.0
      %865 = vadd.xlane.f32.xlu0 %v864
      %v866 = vpop.xlane.xlu0 %865
      %v867 = vsel %vm815, %v851, 0.0
      %868 = vadd.xlane.f32.xlu0 %v867
      %v869 = vpop.xlane.xlu0 %868
      %v870 = vsel %vm815, %v853, 0.0
      %871 = vadd.xlane.f32.xlu0 %v870
      %v872 = vpop.xlane.xlu0 %871
      %v873 = vsel %vm815, %v855, 0.0
      %874 = vadd.xlane.f32.xlu0 %v873
      %v875 = vpop.xlane.xlu0 %874
      %v876 = vsel %vm815, %v857, 0.0
      %877 = vadd.xlane.f32.xlu0 %v876
      %v878 = vpop.xlane.xlu0 %877
      %v879 = vsel %vm815, %v859, 0.0
      %880 = vadd.xlane.f32.xlu0 %v879
      %v881 = vpop.xlane.xlu0 %880
      %v882 = vsel %vm815, %v861, 0.0
      %883 = vadd.xlane.f32.xlu0 %v882
      %v884 = vpop.xlane.xlu0 %883
      %v885 = vsel %vm815, %v863, 0.0
      %886 = vadd.xlane.f32.xlu0 %v885
      %v887 = vpop.xlane.xlu0 %886
      %v888 = vrcp.pop %v866
      %v889 = vmul.f32 %v866, %v888
      %v890 = vsub.f32 1.0, %v889
      %v891 = vmul.f32 %v888, %v890
      %v892 = vadd.f32 %v888, %v891
      %vm893 = vweird.f32 %v866
      %vm894 = vweird.f32 %v888
      %vm895 = vmor %vm893, %vm894
      %v896 = vsel %vm895, %v888, %v892
      %v897 = vand.u32 2147483647, %v866
      %vm898 = vcmp.eq.f32.partialorder %v897, 8.507059e+37
      %v899 = vand.u32 %v866, 2147483648
      %v900 = vor.u32 1.1754944e-38, %v899
      %v901 = vsel %vm898, %v900, %v896
      %v902 = vmul.f32 %v849, %v901
      %v903 = vrcp.pop %v869
      %v904 = vmul.f32 %v869, %v903
      %v905 = vsub.f32 1.0, %v904
      %v906 = vmul.f32 %v903, %v905
      %v907 = vadd.f32 %v903, %v906
      %vm908 = vweird.f32 %v869
      %vm909 = vweird.f32 %v903
      %vm910 = vmor %vm908, %vm909
      %v911 = vsel %vm910, %v903, %v907
      %v912 = vand.u32 2147483647, %v869
      %vm913 = vcmp.eq.f32.partialorder %v912, 8.507059e+37
      %v914 = vand.u32 %v869, 2147483648
      %v915 = vor.u32 1.1754944e-38, %v914
      %v916 = vsel %vm913, %v915, %v911
      %v917 = vmul.f32 %v851, %v916
      %v918 = vrcp.pop %v872
      %v919 = vmul.f32 %v872, %v918
      %v920 = vsub.f32 1.0, %v919
      %v921 = vmul.f32 %v918, %v920
      %v922 = vadd.f32 %v918, %v921
      %vm923 = vweird.f32 %v872
      %vm924 = vweird.f32 %v918
      %vm925 = vmor %vm923, %vm924
      %v926 = vsel %vm925, %v918, %v922
      %v927 = vand.u32 2147483647, %v872
      %vm928 = vcmp.eq.f32.partialorder %v927, 8.507059e+37
      %v929 = vand.u32 %v872, 2147483648
      %v930 = vor.u32 1.1754944e-38, %v929
      %v931 = vsel %vm928, %v930, %v926
      %v932 = vmul.f32 %v853, %v931
      %v933 = vrcp.pop %v875
      %v934 = vmul.f32 %v875, %v933
      %v935 = vsub.f32 1.0, %v934
      %v936 = vmul.f32 %v933, %v935
      %v937 = vadd.f32 %v933, %v936
      %vm938 = vweird.f32 %v875
      %vm939 = vweird.f32 %v933
      %vm940 = vmor %vm938, %vm939
      %v941 = vsel %vm940, %v933, %v937
      %v942 = vand.u32 2147483647, %v875
      %vm943 = vcmp.eq.f32.partialorder %v942, 8.507059e+37
      %v944 = vand.u32 %v875, 2147483648
      %v945 = vor.u32 1.1754944e-38, %v944
      %v946 = vsel %vm943, %v945, %v941
      %v947 = vmul.f32 %v855, %v946
      %v948 = vrcp.pop %v878
      %v949 = vmul.f32 %v878, %v948
      %v950 = vsub.f32 1.0, %v949
      %v951 = vmul.f32 %v948, %v950
      %v952 = vadd.f32 %v948, %v951
      %vm953 = vweird.f32 %v878
      %vm954 = vweird.f32 %v948
      %vm955 = vmor %vm953, %vm954
      %v956 = vsel %vm955, %v948, %v952
      %v957 = vand.u32 2147483647, %v878
      %vm958 = vcmp.eq.f32.partialorder %v957, 8.507059e+37
      %v959 = vand.u32 %v878, 2147483648
      %v960 = vor.u32 1.1754944e-38, %v959
      %v961 = vsel %vm958, %v960, %v956
      %v962 = vmul.f32 %v857, %v961
      %v963 = vrcp.pop %v881
      %v964 = vmul.f32 %v881, %v963
      %v965 = vsub.f32 1.0, %v964
      %v966 = vmul.f32 %v963, %v965
      %v967 = vadd.f32 %v963, %v966
      %vm968 = vweird.f32 %v881
      %vm969 = vweird.f32 %v963
      %vm970 = vmor %vm968, %vm969
      %v971 = vsel %vm970, %v963, %v967
      %v972 = vand.u32 2147483647, %v881
      %vm973 = vcmp.eq.f32.partialorder %v972, 8.507059e+37
      %v974 = vand.u32 %v881, 2147483648
      %v975 = vor.u32 1.1754944e-38, %v974
      %v976 = vsel %vm973, %v975, %v971
      %v977 = vmul.f32 %v859, %v976
      %v978 = vrcp.pop %v884
      %v979 = vmul.f32 %v884, %v978
      %v980 = vsub.f32 1.0, %v979
      %v981 = vmul.f32 %v978, %v980
      %v982 = vadd.f32 %v978, %v981
      %vm983 = vweird.f32 %v884
      %vm984 = vweird.f32 %v978
      %vm985 = vmor %vm983, %vm984
      %v986 = vsel %vm985, %v978, %v982
      %v987 = vand.u32 2147483647, %v884
      %vm988 = vcmp.eq.f32.partialorder %v987, 8.507059e+37
      %v989 = vand.u32 %v884, 2147483648
      %v990 = vor.u32 1.1754944e-38, %v989
      %v991 = vsel %vm988, %v990, %v986
      %v992 = vmul.f32 %v861, %v991
      %v993 = vrcp.pop %v887
      %v994 = vmul.f32 %v887, %v993
      %v995 = vsub.f32 1.0, %v994
      %v996 = vmul.f32 %v993, %v995
      %v997 = vadd.f32 %v993, %v996
      %vm998 = vweird.f32 %v887
      %vm999 = vweird.f32 %v993
      %vm1000 = vmor %vm998, %vm999
      %v1001 = vsel %vm1000, %v993, %v997
      %v1002 = vand.u32 2147483647, %v887
      %vm1003 = vcmp.eq.f32.partialorder %v1002, 8.507059e+37
      %v1004 = vand.u32 %v887, 2147483648
      %v1005 = vor.u32 1.1754944e-38, %v1004
      %v1006 = vsel %vm1003, %v1005, %v1001
      %v1007 = vmul.f32 %v863, %v1006
      %v1008 = vpack.c.bf16 %v643, %v643
      %v1009 = vpack.c.bf16 %v917, %v902
      %v1010 = vpack.c.bf16 %v947, %v932
      %v1011 = vpack.c.bf16 %v977, %v962
      %v1012 = vpack.c.bf16 %v1007, %v992
      %v1014 = vsel %vm815, %v1009, 0
      %v1017 = vsel %vm815, %v1010, 0
      %v1020 = vsel %vm815, %v1011, 0
      %v1023 = vsel %vm815, %v1012, 0
      %vm1025 = vcmask 1043456
      %v1027 = vsel %vm1025, %v1008, 0
      %1029 = vmatpush.bf16.msra.mxu0 0
      %1030 = vmatpush.bf16.msra.mxu0 0
      %1031 = vmatpush.bf16.msra.mxu0 0
      %1032 = vmatpush.bf16.msra.mxu0 0
      %1033 = vmatpush.bf16.msra.mxu0 0
      %1034 = vmatpush.bf16.msra.mxu0 0
      %1035 = vmatpush.bf16.msra.mxu0 0
      %1036 = vmatpush.bf16.msra.mxu0 %v1027
      %1037 = vmatmul.bf16.gmra.mxu0 %v1014
      %v1038 = vpop.f32.mrf.mxu0
      %v1039 = vadd.f32 0.0, %v1038
      %v1040 = vpop.f32.mrf.mxu0
      %v1041 = vadd.f32 0.0, %v1040
      %1042 = vmatmul.bf16.gmra.mxu0 %v1017
      %v1043 = vpop.f32.mrf.mxu0
      %v1044 = vadd.f32 0.0, %v1043
      %v1045 = vpop.f32.mrf.mxu0
      %v1046 = vadd.f32 0.0, %v1045
      %1047 = vmatmul.bf16.gmra.mxu0 %v1020
      %v1048 = vpop.f32.mrf.mxu0
      %v1049 = vadd.f32 0.0, %v1048
      %v1050 = vpop.f32.mrf.mxu0
      %v1051 = vadd.f32 0.0, %v1050
      %1052 = vmatmul.bf16.gmra.mxu0 %v1023
      %v1053 = vpop.f32.mrf.mxu0
      %v1054 = vadd.f32 0.0, %v1053
      %v1055 = vpop.f32.mrf.mxu0
      %v1056 = vadd.f32 0.0, %v1055
      %1057 = vdwg.mxu0
      %v1059 = vunpack.c.l.b16 %v646
      %v1060 = vpack.c.b16 %v1059, %v1059
      %1061 = vrot.lane.b32.xlu0 %v1060, 96
      %v1062 = vpop.permute.xlu0 %1061
      %v1064 = vunpack.c.l.b16 %v654
      %v1065 = vpack.c.b16 %v1064, %v1064
      %1066 = vrot.lane.b32.xlu0 %v1065, 96
      %v1067 = vpop.permute.xlu0 %1066
      %v1069 = vsel %vm662, %v1062, 0
      %v1072 = vsel %vm662, %v1067, 0
      %1074 = vmatpush.bf16.xpose.msra.mxu0 0
      %1075 = vmatpush.bf16.xpose.msra.mxu0 0
      %1076 = vmatpush.bf16.xpose.msra.mxu0 0
      %1077 = vmatpush.bf16.xpose.msra.mxu0 0
      %1078 = vmatpush.bf16.xpose.msra.mxu0 0
      %1079 = vmatpush.bf16.xpose.msra.mxu0 0
      %1080 = vmatpush.bf16.xpose.msra.mxu0 0
      %1081 = vmatpush.bf16.xpose.msra.mxu0 %v1072
      %1082 = vmatmul.bf16.gmra.mxu0 %v1069
      %v1083 = vpop.f32.mrf.mxu0
      %v1084 = vadd.f32 0.0, %v1083
      %v1085 = vpop.f32.mrf.mxu0
      %1086 = vdwg.mxu0
      %v1088 = vunpack.c.l.b16 %v647
      %v1089 = vpack.c.b16 %v1088, %v1088
      %1090 = vrot.lane.b32.xlu0 %v1089, 96
      %v1091 = vpop.permute.xlu0 %1090
      %v1093 = vunpack.c.l.b16 %v655
      %v1094 = vpack.c.b16 %v1093, %v1093
      %1095 = vrot.lane.b32.xlu0 %v1094, 96
      %v1096 = vpop.permute.xlu0 %1095
      %v1098 = vsel %vm662, %v1091, 0
      %v1101 = vsel %vm662, %v1096, 0
      %1103 = vmatpush.bf16.xpose.msra.mxu0 0
      %1104 = vmatpush.bf16.xpose.msra.mxu0 0
      %1105 = vmatpush.bf16.xpose.msra.mxu0 0
      %1106 = vmatpush.bf16.xpose.msra.mxu0 0
      %1107 = vmatpush.bf16.xpose.msra.mxu0 0
      %1108 = vmatpush.bf16.xpose.msra.mxu0 0
      %1109 = vmatpush.bf16.xpose.msra.mxu0 0
      %1110 = vmatpush.bf16.xpose.msra.mxu0 %v1101
      %1111 = vmatmul.bf16.gmra.mxu0 %v1098
      %v1112 = vpop.f32.mrf.mxu0
      %v1113 = vadd.f32 0.0, %v1112
      %v1114 = vpop.f32.mrf.mxu0
      %1115 = vdwg.mxu0
      %v1117 = vunpack.c.l.b16 %v648
      %v1118 = vpack.c.b16 %v1117, %v1117
      %1119 = vrot.lane.b32.xlu0 %v1118, 96
      %v1120 = vpop.permute.xlu0 %1119
      %v1122 = vunpack.c.l.b16 %v656
      %v1123 = vpack.c.b16 %v1122, %v1122
      %1124 = vrot.lane.b32.xlu0 %v1123, 96
      %v1125 = vpop.permute.xlu0 %1124
      %v1127 = vsel %vm662, %v1120, 0
      %v1130 = vsel %vm662, %v1125, 0
      %1132 = vmatpush.bf16.xpose.msra.mxu0 0
      %1133 = vmatpush.bf16.xpose.msra.mxu0 0
      %1134 = vmatpush.bf16.xpose.msra.mxu0 0
      %1135 = vmatpush.bf16.xpose.msra.mxu0 0
      %1136 = vmatpush.bf16.xpose.msra.mxu0 0
      %1137 = vmatpush.bf16.xpose.msra.mxu0 0
      %1138 = vmatpush.bf16.xpose.msra.mxu0 0
      %1139 = vmatpush.bf16.xpose.msra.mxu0 %v1130
      %1140 = vmatmul.bf16.gmra.mxu0 %v1127
      %v1141 = vpop.f32.mrf.mxu0
      %v1142 = vadd.f32 0.0, %v1141
      %v1143 = vpop.f32.mrf.mxu0
      %1144 = vdwg.mxu0
      %v1146 = vunpack.c.l.b16 %v649
      %v1147 = vpack.c.b16 %v1146, %v1146
      %1148 = vrot.lane.b32.xlu0 %v1147, 96
      %v1149 = vpop.permute.xlu0 %1148
      %v1151 = vunpack.c.l.b16 %v657
      %v1152 = vpack.c.b16 %v1151, %v1151
      %1153 = vrot.lane.b32.xlu0 %v1152, 96
      %v1154 = vpop.permute.xlu0 %1153
      %v1156 = vsel %vm662, %v1149, 0
      %v1159 = vsel %vm662, %v1154, 0
      %1161 = vmatpush.bf16.xpose.msra.mxu0 0
      %1162 = vmatpush.bf16.xpose.msra.mxu0 0
      %1163 = vmatpush.bf16.xpose.msra.mxu0 0
      %1164 = vmatpush.bf16.xpose.msra.mxu0 0
      %1165 = vmatpush.bf16.xpose.msra.mxu0 0
      %1166 = vmatpush.bf16.xpose.msra.mxu0 0
      %1167 = vmatpush.bf16.xpose.msra.mxu0 0
      %1168 = vmatpush.bf16.xpose.msra.mxu0 %v1159
      %1169 = vmatmul.bf16.gmra.mxu0 %v1156
      %v1170 = vpop.f32.mrf.mxu0
      %v1171 = vadd.f32 0.0, %v1170
      %v1172 = vpop.f32.mrf.mxu0
      %1173 = vdwg.mxu0
      %v1175 = vunpack.c.l.b16 %v650
      %v1176 = vpack.c.b16 %v1175, %v1175
      %1177 = vrot.lane.b32.xlu0 %v1176, 96
      %v1178 = vpop.permute.xlu0 %1177
      %v1180 = vunpack.c.l.b16 %v658
      %v1181 = vpack.c.b16 %v1180, %v1180
      %1182 = vrot.lane.b32.xlu0 %v1181, 96
      %v1183 = vpop.permute.xlu0 %1182
      %v1185 = vsel %vm662, %v1178, 0
      %v1188 = vsel %vm662, %v1183, 0
      %1190 = vmatpush.bf16.xpose.msra.mxu0 0
      %1191 = vmatpush.bf16.xpose.msra.mxu0 0
      %1192 = vmatpush.bf16.xpose.msra.mxu0 0
      %1193 = vmatpush.bf16.xpose.msra.mxu0 0
      %1194 = vmatpush.bf16.xpose.msra.mxu0 0
      %1195 = vmatpush.bf16.xpose.msra.mxu0 0
      %1196 = vmatpush.bf16.xpose.msra.mxu0 0
      %1197 = vmatpush.bf16.xpose.msra.mxu0 %v1188
      %1198 = vmatmul.bf16.gmra.mxu0 %v1185
      %v1199 = vpop.f32.mrf.mxu0
      %v1200 = vadd.f32 0.0, %v1199
      %v1201 = vpop.f32.mrf.mxu0
      %1202 = vdwg.mxu0
      %v1204 = vunpack.c.l.b16 %v651
      %v1205 = vpack.c.b16 %v1204, %v1204
      %1206 = vrot.lane.b32.xlu0 %v1205, 96
      %v1207 = vpop.permute.xlu0 %1206
      %v1209 = vunpack.c.l.b16 %v659
      %v1210 = vpack.c.b16 %v1209, %v1209
      %1211 = vrot.lane.b32.xlu0 %v1210, 96
      %v1212 = vpop.permute.xlu0 %1211
      %v1214 = vsel %vm662, %v1207, 0
      %v1217 = vsel %vm662, %v1212, 0
      %1219 = vmatpush.bf16.xpose.msra.mxu0 0
      %1220 = vmatpush.bf16.xpose.msra.mxu0 0
      %1221 = vmatpush.bf16.xpose.msra.mxu0 0
      %1222 = vmatpush.bf16.xpose.msra.mxu0 0
      %1223 = vmatpush.bf16.xpose.msra.mxu0 0
      %1224 = vmatpush.bf16.xpose.msra.mxu0 0
      %1225 = vmatpush.bf16.xpose.msra.mxu0 0
      %1226 = vmatpush.bf16.xpose.msra.mxu0 %v1217
      %1227 = vmatmul.bf16.gmra.mxu0 %v1214
      %v1228 = vpop.f32.mrf.mxu0
      %v1229 = vadd.f32 0.0, %v1228
      %v1230 = vpop.f32.mrf.mxu0
      %1231 = vdwg.mxu0
      %v1233 = vunpack.c.l.b16 %v652
      %v1234 = vpack.c.b16 %v1233, %v1233
      %1235 = vrot.lane.b32.xlu0 %v1234, 96
      %v1236 = vpop.permute.xlu0 %1235
      %v1238 = vunpack.c.l.b16 %v660
      %v1239 = vpack.c.b16 %v1238, %v1238
      %1240 = vrot.lane.b32.xlu0 %v1239, 96
      %v1241 = vpop.permute.xlu0 %1240
      %v1243 = vsel %vm662, %v1236, 0
      %v1246 = vsel %vm662, %v1241, 0
      %1248 = vmatpush.bf16.xpose.msra.mxu0 0
      %1249 = vmatpush.bf16.xpose.msra.mxu0 0
      %1250 = vmatpush.bf16.xpose.msra.mxu0 0
      %1251 = vmatpush.bf16.xpose.msra.mxu0 0
      %1252 = vmatpush.bf16.xpose.msra.mxu0 0
      %1253 = vmatpush.bf16.xpose.msra.mxu0 0
      %1254 = vmatpush.bf16.xpose.msra.mxu0 0
      %1255 = vmatpush.bf16.xpose.msra.mxu0 %v1246
      %1256 = vmatmul.bf16.gmra.mxu0 %v1243
      %v1257 = vpop.f32.mrf.mxu0
      %v1258 = vadd.f32 0.0, %v1257
      %v1259 = vpop.f32.mrf.mxu0
      %1260 = vdwg.mxu0
      %v1262 = vunpack.c.l.b16 %v653
      %v1263 = vpack.c.b16 %v1262, %v1262
      %1264 = vrot.lane.b32.xlu0 %v1263, 96
      %v1265 = vpop.permute.xlu0 %1264
      %v1267 = vunpack.c.l.b16 %v661
      %v1268 = vpack.c.b16 %v1267, %v1267
      %1269 = vrot.lane.b32.xlu0 %v1268, 96
      %v1270 = vpop.permute.xlu0 %1269
      %v1272 = vsel %vm662, %v1265, 0
      %v1275 = vsel %vm662, %v1270, 0
      %1277 = vmatpush.bf16.xpose.msra.mxu0 0
      %1278 = vmatpush.bf16.xpose.msra.mxu0 0
      %1279 = vmatpush.bf16.xpose.msra.mxu0 0
      %1280 = vmatpush.bf16.xpose.msra.mxu0 0
      %1281 = vmatpush.bf16.xpose.msra.mxu0 0
      %1282 = vmatpush.bf16.xpose.msra.mxu0 0
      %1283 = vmatpush.bf16.xpose.msra.mxu0 0
      %1284 = vmatpush.bf16.xpose.msra.mxu0 %v1275
      %1285 = vmatmul.bf16.gmra.mxu0 %v1272
      %v1286 = vpop.f32.mrf.mxu0
      %v1287 = vadd.f32 0.0, %v1286
      %v1288 = vpop.f32.mrf.mxu0
      %1289 = vdwg.mxu0
      %v1290 = vsel %vm815, %v1084, -inf
      %1291 = vmax.xlane.f32.xlu0 %v1290
      %v1292 = vpop.xlane.xlu0 %1291
      %v1293 = vsel %vm815, %v1113, -inf
      %1294 = vmax.xlane.f32.xlu0 %v1293
      %v1295 = vpop.xlane.xlu0 %1294
      %v1296 = vsel %vm815, %v1142, -inf
      %1297 = vmax.xlane.f32.xlu0 %v1296
      %v1298 = vpop.xlane.xlu0 %1297
      %v1299 = vsel %vm815, %v1171, -inf
      %1300 = vmax.xlane.f32.xlu0 %v1299
      %v1301 = vpop.xlane.xlu0 %1300
      %v1302 = vsel %vm815, %v1200, -inf
      %1303 = vmax.xlane.f32.xlu0 %v1302
      %v1304 = vpop.xlane.xlu0 %1303
      %v1305 = vsel %vm815, %v1229, -inf
      %1306 = vmax.xlane.f32.xlu0 %v1305
      %v1307 = vpop.xlane.xlu0 %1306
      %v1308 = vsel %vm815, %v1258, -inf
      %1309 = vmax.xlane.f32.xlu0 %v1308
      %v1310 = vpop.xlane.xlu0 %1309
      %v1311 = vsel %vm815, %v1287, -inf
      %1312 = vmax.xlane.f32.xlu0 %v1311
      %v1313 = vpop.xlane.xlu0 %1312
      %v1314 = vsub.f32 %v1084, %v1292
      %v1315 = vsub.f32 %v1113, %v1295
      %v1316 = vsub.f32 %v1142, %v1298
      %v1317 = vsub.f32 %v1171, %v1301
      %v1318 = vsub.f32 %v1200, %v1304
      %v1319 = vsub.f32 %v1229, %v1307
      %v1320 = vsub.f32 %v1258, %v1310
      %v1321 = vsub.f32 %v1287, %v1313
      %v1322 = vmul.f32 %v1314, 1.442695
      %v1323 = vpow.pop %v1322
      %v1324 = vmul.f32 %v1315, 1.442695
      %v1325 = vpow.pop %v1324
      %v1326 = vmul.f32 %v1316, 1.442695
      %v1327 = vpow.pop %v1326
      %v1328 = vmul.f32 %v1317, 1.442695
      %v1329 = vpow.pop %v1328
      %v1330 = vmul.f32 %v1318, 1.442695
      %v1331 = vpow.pop %v1330
      %v1332 = vmul.f32 %v1319, 1.442695
      %v1333 = vpow.pop %v1332
      %v1334 = vmul.f32 %v1320, 1.442695
      %v1335 = vpow.pop %v1334
      %v1336 = vmul.f32 %v1321, 1.442695
      %v1337 = vpow.pop %v1336
      %v1338 = vsel %vm815, %v1323, 0.0
      %1339 = vadd.xlane.f32.xlu0 %v1338
      %v1340 = vpop.xlane.xlu0 %1339
      %v1341 = vsel %vm815, %v1325, 0.0
      %1342 = vadd.xlane.f32.xlu0 %v1341
      %v1343 = vpop.xlane.xlu0 %1342
      %v1344 = vsel %vm815, %v1327, 0.0
      %1345 = vadd.xlane.f32.xlu0 %v1344
      %v1346 = vpop.xlane.xlu0 %1345
      %v1347 = vsel %vm815, %v1329, 0.0
      %1348 = vadd.xlane.f32.xlu0 %v1347
      %v1349 = vpop.xlane.xlu0 %1348
      %v1350 = vsel %vm815, %v1331, 0.0
      %1351 = vadd.xlane.f32.xlu0 %v1350
      %v1352 = vpop.xlane.xlu0 %1351
      %v1353 = vsel %vm815, %v1333, 0.0
      %1354 = vadd.xlane.f32.xlu0 %v1353
      %v1355 = vpop.xlane.xlu0 %1354
      %v1356 = vsel %vm815, %v1335, 0.0
      %1357 = vadd.xlane.f32.xlu0 %v1356
      %v1358 = vpop.xlane.xlu0 %1357
      %v1359 = vsel %vm815, %v1337, 0.0
      %1360 = vadd.xlane.f32.xlu0 %v1359
      %v1361 = vpop.xlane.xlu0 %1360
      %v1362 = vrcp.pop %v1340
      %v1363 = vmul.f32 %v1340, %v1362
      %v1364 = vsub.f32 1.0, %v1363
      %v1365 = vmul.f32 %v1362, %v1364
      %v1366 = vadd.f32 %v1362, %v1365
      %vm1367 = vweird.f32 %v1340
      %vm1368 = vweird.f32 %v1362
      %vm1369 = vmor %vm1367, %vm1368
      %v1370 = vsel %vm1369, %v1362, %v1366
      %v1371 = vand.u32 2147483647, %v1340
      %vm1372 = vcmp.eq.f32.partialorder %v1371, 8.507059e+37
      %v1373 = vand.u32 %v1340, 2147483648
      %v1374 = vor.u32 1.1754944e-38, %v1373
      %v1375 = vsel %vm1372, %v1374, %v1370
      %v1376 = vmul.f32 %v1323, %v1375
      %v1377 = vrcp.pop %v1343
      %v1378 = vmul.f32 %v1343, %v1377
      %v1379 = vsub.f32 1.0, %v1378
      %v1380 = vmul.f32 %v1377, %v1379
      %v1381 = vadd.f32 %v1377, %v1380
      %vm1382 = vweird.f32 %v1343
      %vm1383 = vweird.f32 %v1377
      %vm1384 = vmor %vm1382, %vm1383
      %v1385 = vsel %vm1384, %v1377, %v1381
      %v1386 = vand.u32 2147483647, %v1343
      %vm1387 = vcmp.eq.f32.partialorder %v1386, 8.507059e+37
      %v1388 = vand.u32 %v1343, 2147483648
      %v1389 = vor.u32 1.1754944e-38, %v1388
      %v1390 = vsel %vm1387, %v1389, %v1385
      %v1391 = vmul.f32 %v1325, %v1390
      %v1392 = vrcp.pop %v1346
      %v1393 = vmul.f32 %v1346, %v1392
      %v1394 = vsub.f32 1.0, %v1393
      %v1395 = vmul.f32 %v1392, %v1394
      %v1396 = vadd.f32 %v1392, %v1395
      %vm1397 = vweird.f32 %v1346
      %vm1398 = vweird.f32 %v1392
      %vm1399 = vmor %vm1397, %vm1398
      %v1400 = vsel %vm1399, %v1392, %v1396
      %v1401 = vand.u32 2147483647, %v1346
      %vm1402 = vcmp.eq.f32.partialorder %v1401, 8.507059e+37
      %v1403 = vand.u32 %v1346, 2147483648
      %v1404 = vor.u32 1.1754944e-38, %v1403
      %v1405 = vsel %vm1402, %v1404, %v1400
      %v1406 = vmul.f32 %v1327, %v1405
      %v1407 = vrcp.pop %v1349
      %v1408 = vmul.f32 %v1349, %v1407
      %v1409 = vsub.f32 1.0, %v1408
      %v1410 = vmul.f32 %v1407, %v1409
      %v1411 = vadd.f32 %v1407, %v1410
      %vm1412 = vweird.f32 %v1349
      %vm1413 = vweird.f32 %v1407
      %vm1414 = vmor %vm1412, %vm1413
      %v1415 = vsel %vm1414, %v1407, %v1411
      %v1416 = vand.u32 2147483647, %v1349
      %vm1417 = vcmp.eq.f32.partialorder %v1416, 8.507059e+37
      %v1418 = vand.u32 %v1349, 2147483648
      %v1419 = vor.u32 1.1754944e-38, %v1418
      %v1420 = vsel %vm1417, %v1419, %v1415
      %v1421 = vmul.f32 %v1329, %v1420
      %v1422 = vrcp.pop %v1352
      %v1423 = vmul.f32 %v1352, %v1422
      %v1424 = vsub.f32 1.0, %v1423
      %v1425 = vmul.f32 %v1422, %v1424
      %v1426 = vadd.f32 %v1422, %v1425
      %vm1427 = vweird.f32 %v1352
      %vm1428 = vweird.f32 %v1422
      %vm1429 = vmor %vm1427, %vm1428
      %v1430 = vsel %vm1429, %v1422, %v1426
      %v1431 = vand.u32 2147483647, %v1352
      %vm1432 = vcmp.eq.f32.partialorder %v1431, 8.507059e+37
      %v1433 = vand.u32 %v1352, 2147483648
      %v1434 = vor.u32 1.1754944e-38, %v1433
      %v1435 = vsel %vm1432, %v1434, %v1430
      %v1436 = vmul.f32 %v1331, %v1435
      %v1437 = vrcp.pop %v1355
      %v1438 = vmul.f32 %v1355, %v1437
      %v1439 = vsub.f32 1.0, %v1438
      %v1440 = vmul.f32 %v1437, %v1439
      %v1441 = vadd.f32 %v1437, %v1440
      %vm1442 = vweird.f32 %v1355
      %vm1443 = vweird.f32 %v1437
      %vm1444 = vmor %vm1442, %vm1443
      %v1445 = vsel %vm1444, %v1437, %v1441
      %v1446 = vand.u32 2147483647, %v1355
      %vm1447 = vcmp.eq.f32.partialorder %v1446, 8.507059e+37
      %v1448 = vand.u32 %v1355, 2147483648
      %v1449 = vor.u32 1.1754944e-38, %v1448
      %v1450 = vsel %vm1447, %v1449, %v1445
      %v1451 = vmul.f32 %v1333, %v1450
      %v1452 = vrcp.pop %v1358
      %v1453 = vmul.f32 %v1358, %v1452
      %v1454 = vsub.f32 1.0, %v1453
      %v1455 = vmul.f32 %v1452, %v1454
      %v1456 = vadd.f32 %v1452, %v1455
      %vm1457 = vweird.f32 %v1358
      %vm1458 = vweird.f32 %v1452
      %vm1459 = vmor %vm1457, %vm1458
      %v1460 = vsel %vm1459, %v1452, %v1456
      %v1461 = vand.u32 2147483647, %v1358
      %vm1462 = vcmp.eq.f32.partialorder %v1461, 8.507059e+37
      %v1463 = vand.u32 %v1358, 2147483648
      %v1464 = vor.u32 1.1754944e-38, %v1463
      %v1465 = vsel %vm1462, %v1464, %v1460
      %v1466 = vmul.f32 %v1335, %v1465
      %v1467 = vrcp.pop %v1361
      %v1468 = vmul.f32 %v1361, %v1467
      %v1469 = vsub.f32 1.0, %v1468
      %v1470 = vmul.f32 %v1467, %v1469
      %v1471 = vadd.f32 %v1467, %v1470
      %vm1472 = vweird.f32 %v1361
      %vm1473 = vweird.f32 %v1467
      %vm1474 = vmor %vm1472, %vm1473
      %v1475 = vsel %vm1474, %v1467, %v1471
      %v1476 = vand.u32 2147483647, %v1361
      %vm1477 = vcmp.eq.f32.partialorder %v1476, 8.507059e+37
      %v1478 = vand.u32 %v1361, 2147483648
      %v1479 = vor.u32 1.1754944e-38, %v1478
      %v1480 = vsel %vm1477, %v1479, %v1475
      %v1481 = vmul.f32 %v1337, %v1480
      %v1482 = vpack.c.bf16 %v1391, %v1376
      %v1483 = vpack.c.bf16 %v1421, %v1406
      %v1484 = vpack.c.bf16 %v1451, %v1436
      %v1485 = vpack.c.bf16 %v1481, %v1466
      %1487 = vrot.lane.b32.xlu0 %v1008, 96
      %v1488 = vpop.permute.xlu0 %1487
      %v1490 = vsel %vm815, %v1482, 0
      %v1493 = vsel %vm815, %v1483, 0
      %v1496 = vsel %vm815, %v1484, 0
      %v1499 = vsel %vm815, %v1485, 0
      %v1502 = vsel %vm1025, %v1488, 0
      %1504 = vmatpush.bf16.msra.mxu0 0
      %1505 = vmatpush.bf16.msra.mxu0 0
      %1506 = vmatpush.bf16.msra.mxu0 0
      %1507 = vmatpush.bf16.msra.mxu0 0
      %1508 = vmatpush.bf16.msra.mxu0 0
      %1509 = vmatpush.bf16.msra.mxu0 0
      %1510 = vmatpush.bf16.msra.mxu0 0
      %1511 = vmatpush.bf16.msra.mxu0 %v1502
      %1512 = vmatmul.bf16.gmra.mxu0 %v1490
      %v1513 = vpop.f32.mrf.mxu0
      %v1514 = vadd.f32 0.0, %v1513
      %v1515 = vpop.f32.mrf.mxu0
      %v1516 = vadd.f32 0.0, %v1515
      %1517 = vmatmul.bf16.gmra.mxu0 %v1493
      %v1518 = vpop.f32.mrf.mxu0
      %v1519 = vadd.f32 0.0, %v1518
      %v1520 = vpop.f32.mrf.mxu0
      %v1521 = vadd.f32 0.0, %v1520
      %1522 = vmatmul.bf16.gmra.mxu0 %v1496
      %v1523 = vpop.f32.mrf.mxu0
      %v1524 = vadd.f32 0.0, %v1523
      %v1525 = vpop.f32.mrf.mxu0
      %v1526 = vadd.f32 0.0, %v1525
      %1527 = vmatmul.bf16.gmra.mxu0 %v1499
      %v1528 = vpop.f32.mrf.mxu0
      %v1529 = vadd.f32 0.0, %v1528
      %v1530 = vpop.f32.mrf.mxu0
      %v1531 = vadd.f32 0.0, %v1530
      %1532 = vdwg.mxu0
      %1533 = vrot.lane.b32.xlu0 %v1060, 64
      %v1534 = vpop.permute.xlu0 %1533
      %1535 = vrot.lane.b32.xlu0 %v1065, 64
      %v1536 = vpop.permute.xlu0 %1535
      %v1538 = vsel %vm662, %v1534, 0
      %v1541 = vsel %vm662, %v1536, 0
      %1543 = vmatpush.bf16.xpose.msra.mxu0 0
      %1544 = vmatpush.bf16.xpose.msra.mxu0 0
      %1545 = vmatpush.bf16.xpose.msra.mxu0 0
      %1546 = vmatpush.bf16.xpose.msra.mxu0 0
      %1547 = vmatpush.bf16.xpose.msra.mxu0 0
      %1548 = vmatpush.bf16.xpose.msra.mxu0 0
      %1549 = vmatpush.bf16.xpose.msra.mxu0 0
      %1550 = vmatpush.bf16.xpose.msra.mxu0 %v1541
      %1551 = vmatmul.bf16.gmra.mxu0 %v1538
      %v1552 = vpop.f32.mrf.mxu0
      %v1553 = vadd.f32 0.0, %v1552
      %v1554 = vpop.f32.mrf.mxu0
      %1555 = vdwg.mxu0
      %1556 = vrot.lane.b32.xlu0 %v1089, 64
      %v1557 = vpop.permute.xlu0 %1556
      %1558 = vrot.lane.b32.xlu0 %v1094, 64
      %v1559 = vpop.permute.xlu0 %1558
      %v1561 = vsel %vm662, %v1557, 0
      %v1564 = vsel %vm662, %v1559, 0
      %1566 = vmatpush.bf16.xpose.msra.mxu0 0
      %1567 = vmatpush.bf16.xpose.msra.mxu0 0
      %1568 = vmatpush.bf16.xpose.msra.mxu0 0
      %1569 = vmatpush.bf16.xpose.msra.mxu0 0
      %1570 = vmatpush.bf16.xpose.msra.mxu0 0
      %1571 = vmatpush.bf16.xpose.msra.mxu0 0
      %1572 = vmatpush.bf16.xpose.msra.mxu0 0
      %1573 = vmatpush.bf16.xpose.msra.mxu0 %v1564
      %1574 = vmatmul.bf16.gmra.mxu0 %v1561
      %v1575 = vpop.f32.mrf.mxu0
      %v1576 = vadd.f32 0.0, %v1575
      %v1577 = vpop.f32.mrf.mxu0
      %1578 = vdwg.mxu0
      %1579 = vrot.lane.b32.xlu0 %v1118, 64
      %v1580 = vpop.permute.xlu0 %1579
      %1581 = vrot.lane.b32.xlu0 %v1123, 64
      %v1582 = vpop.permute.xlu0 %1581
      %v1584 = vsel %vm662, %v1580, 0
      %v1587 = vsel %vm662, %v1582, 0
      %1589 = vmatpush.bf16.xpose.msra.mxu0 0
      %1590 = vmatpush.bf16.xpose.msra.mxu0 0
      %1591 = vmatpush.bf16.xpose.msra.mxu0 0
      %1592 = vmatpush.bf16.xpose.msra.mxu0 0
      %1593 = vmatpush.bf16.xpose.msra.mxu0 0
      %1594 = vmatpush.bf16.xpose.msra.mxu0 0
      %1595 = vmatpush.bf16.xpose.msra.mxu0 0
      %1596 = vmatpush.bf16.xpose.msra.mxu0 %v1587
      %1597 = vmatmul.bf16.gmra.mxu0 %v1584
      %v1598 = vpop.f32.mrf.mxu0
      %v1599 = vadd.f32 0.0, %v1598
      %v1600 = vpop.f32.mrf.mxu0
      %1601 = vdwg.mxu0
      %1602 = vrot.lane.b32.xlu0 %v1147, 64
      %v1603 = vpop.permute.xlu0 %1602
      %1604 = vrot.lane.b32.xlu0 %v1152, 64
      %v1605 = vpop.permute.xlu0 %1604
      %v1607 = vsel %vm662, %v1603, 0
      %v1610 = vsel %vm662, %v1605, 0
      %1612 = vmatpush.bf16.xpose.msra.mxu0 0
      %1613 = vmatpush.bf16.xpose.msra.mxu0 0
      %1614 = vmatpush.bf16.xpose.msra.mxu0 0
      %1615 = vmatpush.bf16.xpose.msra.mxu0 0
      %1616 = vmatpush.bf16.xpose.msra.mxu0 0
      %1617 = vmatpush.bf16.xpose.msra.mxu0 0
      %1618 = vmatpush.bf16.xpose.msra.mxu0 0
      %1619 = vmatpush.bf16.xpose.msra.mxu0 %v1610
      %1620 = vmatmul.bf16.gmra.mxu0 %v1607
      %v1621 = vpop.f32.mrf.mxu0
      %v1622 = vadd.f32 0.0, %v1621
      %v1623 = vpop.f32.mrf.mxu0
      %1624 = vdwg.mxu0
      %1625 = vrot.lane.b32.xlu0 %v1176, 64
      %v1626 = vpop.permute.xlu0 %1625
      %1627 = vrot.lane.b32.xlu0 %v1181, 64
      %v1628 = vpop.permute.xlu0 %1627
      %v1630 = vsel %vm662, %v1626, 0
      %v1633 = vsel %vm662, %v1628, 0
      %1635 = vmatpush.bf16.xpose.msra.mxu0 0
      %1636 = vmatpush.bf16.xpose.msra.mxu0 0
      %1637 = vmatpush.bf16.xpose.msra.mxu0 0
      %1638 = vmatpush.bf16.xpose.msra.mxu0 0
      %1639 = vmatpush.bf16.xpose.msra.mxu0 0
      %1640 = vmatpush.bf16.xpose.msra.mxu0 0
      %1641 = vmatpush.bf16.xpose.msra.mxu0 0
      %1642 = vmatpush.bf16.xpose.msra.mxu0 %v1633
      %1643 = vmatmul.bf16.gmra.mxu0 %v1630
      %v1644 = vpop.f32.mrf.mxu0
      %v1645 = vadd.f32 0.0, %v1644
      %v1646 = vpop.f32.mrf.mxu0
      %1647 = vdwg.mxu0
      %1648 = vrot.lane.b32.xlu0 %v1205, 64
      %v1649 = vpop.permute.xlu0 %1648
      %1650 = vrot.lane.b32.xlu0 %v1210, 64
      %v1651 = vpop.permute.xlu0 %1650
      %v1653 = vsel %vm662, %v1649, 0
      %v1656 = vsel %vm662, %v1651, 0
      %1658 = vmatpush.bf16.xpose.msra.mxu0 0
      %1659 = vmatpush.bf16.xpose.msra.mxu0 0
      %1660 = vmatpush.bf16.xpose.msra.mxu0 0
      %1661 = vmatpush.bf16.xpose.msra.mxu0 0
      %1662 = vmatpush.bf16.xpose.msra.mxu0 0
      %1663 = vmatpush.bf16.xpose.msra.mxu0 0
      %1664 = vmatpush.bf16.xpose.msra.mxu0 0
      %1665 = vmatpush.bf16.xpose.msra.mxu0 %v1656
      %1666 = vmatmul.bf16.gmra.mxu0 %v1653
      %v1667 = vpop.f32.mrf.mxu0
      %v1668 = vadd.f32 0.0, %v1667
      %v1669 = vpop.f32.mrf.mxu0
      %1670 = vdwg.mxu0
      %1671 = vrot.lane.b32.xlu0 %v1234, 64
      %v1672 = vpop.permute.xlu0 %1671
      %1673 = vrot.lane.b32.xlu0 %v1239, 64
      %v1674 = vpop.permute.xlu0 %1673
      %v1676 = vsel %vm662, %v1672, 0
      %v1679 = vsel %vm662, %v1674, 0
      %1681 = vmatpush.bf16.xpose.msra.mxu0 0
      %1682 = vmatpush.bf16.xpose.msra.mxu0 0
      %1683 = vmatpush.bf16.xpose.msra.mxu0 0
      %1684 = vmatpush.bf16.xpose.msra.mxu0 0
      %1685 = vmatpush.bf16.xpose.msra.mxu0 0
      %1686 = vmatpush.bf16.xpose.msra.mxu0 0
      %1687 = vmatpush.bf16.xpose.msra.mxu0 0
      %1688 = vmatpush.bf16.xpose.msra.mxu0 %v1679
      %1689 = vmatmul.bf16.gmra.mxu0 %v1676
      %v1690 = vpop.f32.mrf.mxu0
      %v1691 = vadd.f32 0.0, %v1690
      %v1692 = vpop.f32.mrf.mxu0
      %1693 = vdwg.mxu0
      %1694 = vrot.lane.b32.xlu0 %v1263, 64
      %v1695 = vpop.permute.xlu0 %1694
      %1696 = vrot.lane.b32.xlu0 %v1268, 64
      %v1697 = vpop.permute.xlu0 %1696
      %v1699 = vsel %vm662, %v1695, 0
      %v1702 = vsel %vm662, %v1697, 0
      %1704 = vmatpush.bf16.xpose.msra.mxu0 0
      %1705 = vmatpush.bf16.xpose.msra.mxu0 0
      %1706 = vmatpush.bf16.xpose.msra.mxu0 0
      %1707 = vmatpush.bf16.xpose.msra.mxu0 0
      %1708 = vmatpush.bf16.xpose.msra.mxu0 0
      %1709 = vmatpush.bf16.xpose.msra.mxu0 0
      %1710 = vmatpush.bf16.xpose.msra.mxu0 0
      %1711 = vmatpush.bf16.xpose.msra.mxu0 %v1702
      %1712 = vmatmul.bf16.gmra.mxu0 %v1699
      %v1713 = vpop.f32.mrf.mxu0
      %v1714 = vadd.f32 0.0, %v1713
      %v1715 = vpop.f32.mrf.mxu0
      %1716 = vdwg.mxu0
      %v1717 = vsel %vm815, %v1553, -inf
      %1718 = vmax.xlane.f32.xlu0 %v1717
      %v1719 = vpop.xlane.xlu0 %1718
      %v1720 = vsel %vm815, %v1576, -inf
      %1721 = vmax.xlane.f32.xlu0 %v1720
      %v1722 = vpop.xlane.xlu0 %1721
      %v1723 = vsel %vm815, %v1599, -inf
      %1724 = vmax.xlane.f32.xlu0 %v1723
      %v1725 = vpop.xlane.xlu0 %1724
      %v1726 = vsel %vm815, %v1622, -inf
      %1727 = vmax.xlane.f32.xlu0 %v1726
      %v1728 = vpop.xlane.xlu0 %1727
      %v1729 = vsel %vm815, %v1645, -inf
      %1730 = vmax.xlane.f32.xlu0 %v1729
      %v1731 = vpop.xlane.xlu0 %1730
      %v1732 = vsel %vm815, %v1668, -inf
      %1733 = vmax.xlane.f32.xlu0 %v1732
      %v1734 = vpop.xlane.xlu0 %1733
      %v1735 = vsel %vm815, %v1691, -inf
      %1736 = vmax.xlane.f32.xlu0 %v1735
      %v1737 = vpop.xlane.xlu0 %1736
      %v1738 = vsel %vm815, %v1714, -inf
      %1739 = vmax.xlane.f32.xlu0 %v1738
      %v1740 = vpop.xlane.xlu0 %1739
      %v1741 = vsub.f32 %v1553, %v1719
      %v1742 = vsub.f32 %v1576, %v1722
      %v1743 = vsub.f32 %v1599, %v1725
      %v1744 = vsub.f32 %v1622, %v1728
      %v1745 = vsub.f32 %v1645, %v1731
      %v1746 = vsub.f32 %v1668, %v1734
      %v1747 = vsub.f32 %v1691, %v1737
      %v1748 = vsub.f32 %v1714, %v1740
      %v1749 = vmul.f32 %v1741, 1.442695
      %v1750 = vpow.pop %v1749
      %v1751 = vmul.f32 %v1742, 1.442695
      %v1752 = vpow.pop %v1751
      %v1753 = vmul.f32 %v1743, 1.442695
      %v1754 = vpow.pop %v1753
      %v1755 = vmul.f32 %v1744, 1.442695
      %v1756 = vpow.pop %v1755
      %v1757 = vmul.f32 %v1745, 1.442695
      %v1758 = vpow.pop %v1757
      %v1759 = vmul.f32 %v1746, 1.442695
      %v1760 = vpow.pop %v1759
      %v1761 = vmul.f32 %v1747, 1.442695
      %v1762 = vpow.pop %v1761
      %v1763 = vmul.f32 %v1748, 1.442695
      %v1764 = vpow.pop %v1763
      %v1765 = vsel %vm815, %v1750, 0.0
      %1766 = vadd.xlane.f32.xlu0 %v1765
      %v1767 = vpop.xlane.xlu0 %1766
      %v1768 = vsel %vm815, %v1752, 0.0
      %1769 = vadd.xlane.f32.xlu0 %v1768
      %v1770 = vpop.xlane.xlu0 %1769
      %v1771 = vsel %vm815, %v1754, 0.0
      %1772 = vadd.xlane.f32.xlu0 %v1771
      %v1773 = vpop.xlane.xlu0 %1772
      %v1774 = vsel %vm815, %v1756, 0.0
      %1775 = vadd.xlane.f32.xlu0 %v1774
      %v1776 = vpop.xlane.xlu0 %1775
      %v1777 = vsel %vm815, %v1758, 0.0
      %1778 = vadd.xlane.f32.xlu0 %v1777
      %v1779 = vpop.xlane.xlu0 %1778
      %v1780 = vsel %vm815, %v1760, 0.0
      %1781 = vadd.xlane.f32.xlu0 %v1780
      %v1782 = vpop.xlane.xlu0 %1781
      %v1783 = vsel %vm815, %v1762, 0.0
      %1784 = vadd.xlane.f32.xlu0 %v1783
      %v1785 = vpop.xlane.xlu0 %1784
      %v1786 = vsel %vm815, %v1764, 0.0
      %1787 = vadd.xlane.f32.xlu0 %v1786
      %v1788 = vpop.xlane.xlu0 %1787
      %v1789 = vrcp.pop %v1767
      %v1790 = vmul.f32 %v1767, %v1789
      %v1791 = vsub.f32 1.0, %v1790
      %v1792 = vmul.f32 %v1789, %v1791
      %v1793 = vadd.f32 %v1789, %v1792
      %vm1794 = vweird.f32 %v1767
      %vm1795 = vweird.f32 %v1789
      %vm1796 = vmor %vm1794, %vm1795
      %v1797 = vsel %vm1796, %v1789, %v1793
      %v1798 = vand.u32 2147483647, %v1767
      %vm1799 = vcmp.eq.f32.partialorder %v1798, 8.507059e+37
      %v1800 = vand.u32 %v1767, 2147483648
      %v1801 = vor.u32 1.1754944e-38, %v1800
      %v1802 = vsel %vm1799, %v1801, %v1797
      %v1803 = vmul.f32 %v1750, %v1802
      %v1804 = vrcp.pop %v1770
      %v1805 = vmul.f32 %v1770, %v1804
      %v1806 = vsub.f32 1.0, %v1805
      %v1807 = vmul.f32 %v1804, %v1806
      %v1808 = vadd.f32 %v1804, %v1807
      %vm1809 = vweird.f32 %v1770
      %vm1810 = vweird.f32 %v1804
      %vm1811 = vmor %vm1809, %vm1810
      %v1812 = vsel %vm1811, %v1804, %v1808
      %v1813 = vand.u32 2147483647, %v1770
      %vm1814 = vcmp.eq.f32.partialorder %v1813, 8.507059e+37
      %v1815 = vand.u32 %v1770, 2147483648
      %v1816 = vor.u32 1.1754944e-38, %v1815
      %v1817 = vsel %vm1814, %v1816, %v1812
      %v1818 = vmul.f32 %v1752, %v1817
      %v1819 = vrcp.pop %v1773
      %v1820 = vmul.f32 %v1773, %v1819
      %v1821 = vsub.f32 1.0, %v1820
      %v1822 = vmul.f32 %v1819, %v1821
      %v1823 = vadd.f32 %v1819, %v1822
      %vm1824 = vweird.f32 %v1773
      %vm1825 = vweird.f32 %v1819
      %vm1826 = vmor %vm1824, %vm1825
      %v1827 = vsel %vm1826, %v1819, %v1823
      %v1828 = vand.u32 2147483647, %v1773
      %vm1829 = vcmp.eq.f32.partialorder %v1828, 8.507059e+37
      %v1830 = vand.u32 %v1773, 2147483648
      %v1831 = vor.u32 1.1754944e-38, %v1830
      %v1832 = vsel %vm1829, %v1831, %v1827
      %v1833 = vmul.f32 %v1754, %v1832
      %v1834 = vrcp.pop %v1776
      %v1835 = vmul.f32 %v1776, %v1834
      %v1836 = vsub.f32 1.0, %v1835
      %v1837 = vmul.f32 %v1834, %v1836
      %v1838 = vadd.f32 %v1834, %v1837
      %vm1839 = vweird.f32 %v1776
      %vm1840 = vweird.f32 %v1834
      %vm1841 = vmor %vm1839, %vm1840
      %v1842 = vsel %vm1841, %v1834, %v1838
      %v1843 = vand.u32 2147483647, %v1776
      %vm1844 = vcmp.eq.f32.partialorder %v1843, 8.507059e+37
      %v1845 = vand.u32 %v1776, 2147483648
      %v1846 = vor.u32 1.1754944e-38, %v1845
      %v1847 = vsel %vm1844, %v1846, %v1842
      %v1848 = vmul.f32 %v1756, %v1847
      %v1849 = vrcp.pop %v1779
      %v1850 = vmul.f32 %v1779, %v1849
      %v1851 = vsub.f32 1.0, %v1850
      %v1852 = vmul.f32 %v1849, %v1851
      %v1853 = vadd.f32 %v1849, %v1852
      %vm1854 = vweird.f32 %v1779
      %vm1855 = vweird.f32 %v1849
      %vm1856 = vmor %vm1854, %vm1855
      %v1857 = vsel %vm1856, %v1849, %v1853
      %v1858 = vand.u32 2147483647, %v1779
      %vm1859 = vcmp.eq.f32.partialorder %v1858, 8.507059e+37
      %v1860 = vand.u32 %v1779, 2147483648
      %v1861 = vor.u32 1.1754944e-38, %v1860
      %v1862 = vsel %vm1859, %v1861, %v1857
      %v1863 = vmul.f32 %v1758, %v1862
      %v1864 = vrcp.pop %v1782
      %v1865 = vmul.f32 %v1782, %v1864
      %v1866 = vsub.f32 1.0, %v1865
      %v1867 = vmul.f32 %v1864, %v1866
      %v1868 = vadd.f32 %v1864, %v1867
      %vm1869 = vweird.f32 %v1782
      %vm1870 = vweird.f32 %v1864
      %vm1871 = vmor %vm1869, %vm1870
      %v1872 = vsel %vm1871, %v1864, %v1868
      %v1873 = vand.u32 2147483647, %v1782
      %vm1874 = vcmp.eq.f32.partialorder %v1873, 8.507059e+37
      %v1875 = vand.u32 %v1782, 2147483648
      %v1876 = vor.u32 1.1754944e-38, %v1875
      %v1877 = vsel %vm1874, %v1876, %v1872
      %v1878 = vmul.f32 %v1760, %v1877
      %v1879 = vrcp.pop %v1785
      %v1880 = vmul.f32 %v1785, %v1879
      %v1881 = vsub.f32 1.0, %v1880
      %v1882 = vmul.f32 %v1879, %v1881
      %v1883 = vadd.f32 %v1879, %v1882
      %vm1884 = vweird.f32 %v1785
      %vm1885 = vweird.f32 %v1879
      %vm1886 = vmor %vm1884, %vm1885
      %v1887 = vsel %vm1886, %v1879, %v1883
      %v1888 = vand.u32 2147483647, %v1785
      %vm1889 = vcmp.eq.f32.partialorder %v1888, 8.507059e+37
      %v1890 = vand.u32 %v1785, 2147483648
      %v1891 = vor.u32 1.1754944e-38, %v1890
      %v1892 = vsel %vm1889, %v1891, %v1887
      %v1893 = vmul.f32 %v1762, %v1892
      %v1894 = vrcp.pop %v1788
      %v1895 = vmul.f32 %v1788, %v1894
      %v1896 = vsub.f32 1.0, %v1895
      %v1897 = vmul.f32 %v1894, %v1896
      %v1898 = vadd.f32 %v1894, %v1897
      %vm1899 = vweird.f32 %v1788
      %vm1900 = vweird.f32 %v1894
      %vm1901 = vmor %vm1899, %vm1900
      %v1902 = vsel %vm1901, %v1894, %v1898
      %v1903 = vand.u32 2147483647, %v1788
      %vm1904 = vcmp.eq.f32.partialorder %v1903, 8.507059e+37
      %v1905 = vand.u32 %v1788, 2147483648
      %v1906 = vor.u32 1.1754944e-38, %v1905
      %v1907 = vsel %vm1904, %v1906, %v1902
      %v1908 = vmul.f32 %v1764, %v1907
      %v1909 = vpack.c.bf16 %v1818, %v1803
      %v1910 = vpack.c.bf16 %v1848, %v1833
      %v1911 = vpack.c.bf16 %v1878, %v1863
      %v1912 = vpack.c.bf16 %v1908, %v1893
      %1913 = vrot.lane.b32.xlu0 %v1008, 64
      %v1914 = vpop.permute.xlu0 %1913
      %v1916 = vsel %vm815, %v1909, 0
      %v1919 = vsel %vm815, %v1910, 0
      %v1922 = vsel %vm815, %v1911, 0
      %v1925 = vsel %vm815, %v1912, 0
      %v1928 = vsel %vm1025, %v1914, 0
      %1930 = vmatpush.bf16.msra.mxu0 0
      %1931 = vmatpush.bf16.msra.mxu0 0
      %1932 = vmatpush.bf16.msra.mxu0 0
      %1933 = vmatpush.bf16.msra.mxu0 0
      %1934 = vmatpush.bf16.msra.mxu0 0
      %1935 = vmatpush.bf16.msra.mxu0 0
      %1936 = vmatpush.bf16.msra.mxu0 0
      %1937 = vmatpush.bf16.msra.mxu0 %v1928
      %1938 = vmatmul.bf16.gmra.mxu0 %v1916
      %v1939 = vpop.f32.mrf.mxu0
      %v1940 = vadd.f32 0.0, %v1939
      %v1941 = vpop.f32.mrf.mxu0
      %v1942 = vadd.f32 0.0, %v1941
      %1943 = vmatmul.bf16.gmra.mxu0 %v1919
      %v1944 = vpop.f32.mrf.mxu0
      %v1945 = vadd.f32 0.0, %v1944
      %v1946 = vpop.f32.mrf.mxu0
      %v1947 = vadd.f32 0.0, %v1946
      %1948 = vmatmul.bf16.gmra.mxu0 %v1922
      %v1949 = vpop.f32.mrf.mxu0
      %v1950 = vadd.f32 0.0, %v1949
      %v1951 = vpop.f32.mrf.mxu0
      %v1952 = vadd.f32 0.0, %v1951
      %1953 = vmatmul.bf16.gmra.mxu0 %v1925
      %v1954 = vpop.f32.mrf.mxu0
      %v1955 = vadd.f32 0.0, %v1954
      %v1956 = vpop.f32.mrf.mxu0
      %v1957 = vadd.f32 0.0, %v1956
      %1958 = vdwg.mxu0
      %1959 = vrot.lane.b32.xlu0 %v1060, 32
      %v1960 = vpop.permute.xlu0 %1959
      %1961 = vrot.lane.b32.xlu0 %v1065, 32
      %v1962 = vpop.permute.xlu0 %1961
      %v1964 = vsel %vm662, %v1960, 0
      %v1967 = vsel %vm662, %v1962, 0
      %1969 = vmatpush.bf16.xpose.msra.mxu0 0
      %1970 = vmatpush.bf16.xpose.msra.mxu0 0
      %1971 = vmatpush.bf16.xpose.msra.mxu0 0
      %1972 = vmatpush.bf16.xpose.msra.mxu0 0
      %1973 = vmatpush.bf16.xpose.msra.mxu0 0
      %1974 = vmatpush.bf16.xpose.msra.mxu0 0
      %1975 = vmatpush.bf16.xpose.msra.mxu0 0
      %1976 = vmatpush.bf16.xpose.msra.mxu0 %v1967
      %1977 = vmatmul.bf16.gmra.mxu0 %v1964
      %v1978 = vpop.f32.mrf.mxu0
      %v1979 = vadd.f32 0.0, %v1978
      %v1980 = vpop.f32.mrf.mxu0
      %1981 = vdwg.mxu0
      %1982 = vrot.lane.b32.xlu0 %v1089, 32
      %v1983 = vpop.permute.xlu0 %1982
      %1984 = vrot.lane.b32.xlu0 %v1094, 32
      %v1985 = vpop.permute.xlu0 %1984
      %v1987 = vsel %vm662, %v1983, 0
      %v1990 = vsel %vm662, %v1985, 0
      %1992 = vmatpush.bf16.xpose.msra.mxu0 0
      %1993 = vmatpush.bf16.xpose.msra.mxu0 0
      %1994 = vmatpush.bf16.xpose.msra.mxu0 0
      %1995 = vmatpush.bf16.xpose.msra.mxu0 0
      %1996 = vmatpush.bf16.xpose.msra.mxu0 0
      %1997 = vmatpush.bf16.xpose.msra.mxu0 0
      %1998 = vmatpush.bf16.xpose.msra.mxu0 0
      %1999 = vmatpush.bf16.xpose.msra.mxu0 %v1990
      %2000 = vmatmul.bf16.gmra.mxu0 %v1987
      %v2001 = vpop.f32.mrf.mxu0
      %v2002 = vadd.f32 0.0, %v2001
      %v2003 = vpop.f32.mrf.mxu0
      %2004 = vdwg.mxu0
      %2005 = vrot.lane.b32.xlu0 %v1118, 32
      %v2006 = vpop.permute.xlu0 %2005
      %2007 = vrot.lane.b32.xlu0 %v1123, 32
      %v2008 = vpop.permute.xlu0 %2007
      %v2010 = vsel %vm662, %v2006, 0
      %v2013 = vsel %vm662, %v2008, 0
      %2015 = vmatpush.bf16.xpose.msra.mxu0 0
      %2016 = vmatpush.bf16.xpose.msra.mxu0 0
      %2017 = vmatpush.bf16.xpose.msra.mxu0 0
      %2018 = vmatpush.bf16.xpose.msra.mxu0 0
      %2019 = vmatpush.bf16.xpose.msra.mxu0 0
      %2020 = vmatpush.bf16.xpose.msra.mxu0 0
      %2021 = vmatpush.bf16.xpose.msra.mxu0 0
      %2022 = vmatpush.bf16.xpose.msra.mxu0 %v2013
      %2023 = vmatmul.bf16.gmra.mxu0 %v2010
      %v2024 = vpop.f32.mrf.mxu0
      %v2025 = vadd.f32 0.0, %v2024
      %v2026 = vpop.f32.mrf.mxu0
      %2027 = vdwg.mxu0
      %2028 = vrot.lane.b32.xlu0 %v1147, 32
      %v2029 = vpop.permute.xlu0 %2028
      %2030 = vrot.lane.b32.xlu0 %v1152, 32
      %v2031 = vpop.permute.xlu0 %2030
      %v2033 = vsel %vm662, %v2029, 0
      %v2036 = vsel %vm662, %v2031, 0
      %2038 = vmatpush.bf16.xpose.msra.mxu0 0
      %2039 = vmatpush.bf16.xpose.msra.mxu0 0
      %2040 = vmatpush.bf16.xpose.msra.mxu0 0
      %2041 = vmatpush.bf16.xpose.msra.mxu0 0
      %2042 = vmatpush.bf16.xpose.msra.mxu0 0
      %2043 = vmatpush.bf16.xpose.msra.mxu0 0
      %2044 = vmatpush.bf16.xpose.msra.mxu0 0
      %2045 = vmatpush.bf16.xpose.msra.mxu0 %v2036
      %2046 = vmatmul.bf16.gmra.mxu0 %v2033
      %v2047 = vpop.f32.mrf.mxu0
      %v2048 = vadd.f32 0.0, %v2047
      %v2049 = vpop.f32.mrf.mxu0
      %2050 = vdwg.mxu0
      %2051 = vrot.lane.b32.xlu0 %v1176, 32
      %v2052 = vpop.permute.xlu0 %2051
      %2053 = vrot.lane.b32.xlu0 %v1181, 32
      %v2054 = vpop.permute.xlu0 %2053
      %v2056 = vsel %vm662, %v2052, 0
      %v2059 = vsel %vm662, %v2054, 0
      %2061 = vmatpush.bf16.xpose.msra.mxu0 0
      %2062 = vmatpush.bf16.xpose.msra.mxu0 0
      %2063 = vmatpush.bf16.xpose.msra.mxu0 0
      %2064 = vmatpush.bf16.xpose.msra.mxu0 0
      %2065 = vmatpush.bf16.xpose.msra.mxu0 0
      %2066 = vmatpush.bf16.xpose.msra.mxu0 0
      %2067 = vmatpush.bf16.xpose.msra.mxu0 0
      %2068 = vmatpush.bf16.xpose.msra.mxu0 %v2059
      %2069 = vmatmul.bf16.gmra.mxu0 %v2056
      %v2070 = vpop.f32.mrf.mxu0
      %v2071 = vadd.f32 0.0, %v2070
      %v2072 = vpop.f32.mrf.mxu0
      %2073 = vdwg.mxu0
      %2074 = vrot.lane.b32.xlu0 %v1205, 32
      %v2075 = vpop.permute.xlu0 %2074
      %2076 = vrot.lane.b32.xlu0 %v1210, 32
      %v2077 = vpop.permute.xlu0 %2076
      %v2079 = vsel %vm662, %v2075, 0
      %v2082 = vsel %vm662, %v2077, 0
      %2084 = vmatpush.bf16.xpose.msra.mxu0 0
      %2085 = vmatpush.bf16.xpose.msra.mxu0 0
      %2086 = vmatpush.bf16.xpose.msra.mxu0 0
      %2087 = vmatpush.bf16.xpose.msra.mxu0 0
      %2088 = vmatpush.bf16.xpose.msra.mxu0 0
      %2089 = vmatpush.bf16.xpose.msra.mxu0 0
      %2090 = vmatpush.bf16.xpose.msra.mxu0 0
      %2091 = vmatpush.bf16.xpose.msra.mxu0 %v2082
      %2092 = vmatmul.bf16.gmra.mxu0 %v2079
      %v2093 = vpop.f32.mrf.mxu0
      %v2094 = vadd.f32 0.0, %v2093
      %v2095 = vpop.f32.mrf.mxu0
      %2096 = vdwg.mxu0
      %2097 = vrot.lane.b32.xlu0 %v1234, 32
      %v2098 = vpop.permute.xlu0 %2097
      %2099 = vrot.lane.b32.xlu0 %v1239, 32
      %v2100 = vpop.permute.xlu0 %2099
      %v2102 = vsel %vm662, %v2098, 0
      %v2105 = vsel %vm662, %v2100, 0
      %2107 = vmatpush.bf16.xpose.msra.mxu0 0
      %2108 = vmatpush.bf16.xpose.msra.mxu0 0
      %2109 = vmatpush.bf16.xpose.msra.mxu0 0
      %2110 = vmatpush.bf16.xpose.msra.mxu0 0
      %2111 = vmatpush.bf16.xpose.msra.mxu0 0
      %2112 = vmatpush.bf16.xpose.msra.mxu0 0
      %2113 = vmatpush.bf16.xpose.msra.mxu0 0
      %2114 = vmatpush.bf16.xpose.msra.mxu0 %v2105
      %2115 = vmatmul.bf16.gmra.mxu0 %v2102
      %v2116 = vpop.f32.mrf.mxu0
      %v2117 = vadd.f32 0.0, %v2116
      %v2118 = vpop.f32.mrf.mxu0
      %2119 = vdwg.mxu0
      %2120 = vrot.lane.b32.xlu0 %v1263, 32
      %v2121 = vpop.permute.xlu0 %2120
      %2122 = vrot.lane.b32.xlu0 %v1268, 32
      %v2123 = vpop.permute.xlu0 %2122
      %v2125 = vsel %vm662, %v2121, 0
      %v2128 = vsel %vm662, %v2123, 0
      %2130 = vmatpush.bf16.xpose.msra.mxu0 0
      %2131 = vmatpush.bf16.xpose.msra.mxu0 0
      %2132 = vmatpush.bf16.xpose.msra.mxu0 0
      %2133 = vmatpush.bf16.xpose.msra.mxu0 0
      %2134 = vmatpush.bf16.xpose.msra.mxu0 0
      %2135 = vmatpush.bf16.xpose.msra.mxu0 0
      %2136 = vmatpush.bf16.xpose.msra.mxu0 0
      %2137 = vmatpush.bf16.xpose.msra.mxu0 %v2128
      %2138 = vmatmul.bf16.gmra.mxu0 %v2125
      %v2139 = vpop.f32.mrf.mxu0
      %v2140 = vadd.f32 0.0, %v2139
      %v2141 = vpop.f32.mrf.mxu0
      %2142 = vdwg.mxu0
      %v2143 = vsel %vm815, %v1979, -inf
      %2144 = vmax.xlane.f32.xlu0 %v2143
      %v2145 = vpop.xlane.xlu0 %2144
      %v2146 = vsel %vm815, %v2002, -inf
      %2147 = vmax.xlane.f32.xlu0 %v2146
      %v2148 = vpop.xlane.xlu0 %2147
      %v2149 = vsel %vm815, %v2025, -inf
      %2150 = vmax.xlane.f32.xlu0 %v2149
      %v2151 = vpop.xlane.xlu0 %2150
      %v2152 = vsel %vm815, %v2048, -inf
      %2153 = vmax.xlane.f32.xlu0 %v2152
      %v2154 = vpop.xlane.xlu0 %2153
      %v2155 = vsel %vm815, %v2071, -inf
      %2156 = vmax.xlane.f32.xlu0 %v2155
      %v2157 = vpop.xlane.xlu0 %2156
      %v2158 = vsel %vm815, %v2094, -inf
      %2159 = vmax.xlane.f32.xlu0 %v2158
      %v2160 = vpop.xlane.xlu0 %2159
      %v2161 = vsel %vm815, %v2117, -inf
      %2162 = vmax.xlane.f32.xlu0 %v2161
      %v2163 = vpop.xlane.xlu0 %2162
      %v2164 = vsel %vm815, %v2140, -inf
      %2165 = vmax.xlane.f32.xlu0 %v2164
      %v2166 = vpop.xlane.xlu0 %2165
      %v2167 = vsub.f32 %v1979, %v2145
      %v2168 = vsub.f32 %v2002, %v2148
      %v2169 = vsub.f32 %v2025, %v2151
      %v2170 = vsub.f32 %v2048, %v2154
      %v2171 = vsub.f32 %v2071, %v2157
      %v2172 = vsub.f32 %v2094, %v2160
      %v2173 = vsub.f32 %v2117, %v2163
      %v2174 = vsub.f32 %v2140, %v2166
      %v2175 = vmul.f32 %v2167, 1.442695
      %v2176 = vpow.pop %v2175
      %v2177 = vmul.f32 %v2168, 1.442695
      %v2178 = vpow.pop %v2177
      %v2179 = vmul.f32 %v2169, 1.442695
      %v2180 = vpow.pop %v2179
      %v2181 = vmul.f32 %v2170, 1.442695
      %v2182 = vpow.pop %v2181
      %v2183 = vmul.f32 %v2171, 1.442695
      %v2184 = vpow.pop %v2183
      %v2185 = vmul.f32 %v2172, 1.442695
      %v2186 = vpow.pop %v2185
      %v2187 = vmul.f32 %v2173, 1.442695
      %v2188 = vpow.pop %v2187
      %v2189 = vmul.f32 %v2174, 1.442695
      %v2190 = vpow.pop %v2189
      %v2191 = vsel %vm815, %v2176, 0.0
      %2192 = vadd.xlane.f32.xlu0 %v2191
      %v2193 = vpop.xlane.xlu0 %2192
      %v2194 = vsel %vm815, %v2178, 0.0
      %2195 = vadd.xlane.f32.xlu0 %v2194
      %v2196 = vpop.xlane.xlu0 %2195
      %v2197 = vsel %vm815, %v2180, 0.0
      %2198 = vadd.xlane.f32.xlu0 %v2197
      %v2199 = vpop.xlane.xlu0 %2198
      %v2200 = vsel %vm815, %v2182, 0.0
      %2201 = vadd.xlane.f32.xlu0 %v2200
      %v2202 = vpop.xlane.xlu0 %2201
      %v2203 = vsel %vm815, %v2184, 0.0
      %2204 = vadd.xlane.f32.xlu0 %v2203
      %v2205 = vpop.xlane.xlu0 %2204
      %v2206 = vsel %vm815, %v2186, 0.0
      %2207 = vadd.xlane.f32.xlu0 %v2206
      %v2208 = vpop.xlane.xlu0 %2207
      %v2209 = vsel %vm815, %v2188, 0.0
      %2210 = vadd.xlane.f32.xlu0 %v2209
      %v2211 = vpop.xlane.xlu0 %2210
      %v2212 = vsel %vm815, %v2190, 0.0
      %2213 = vadd.xlane.f32.xlu0 %v2212
      %v2214 = vpop.xlane.xlu0 %2213
      %v2215 = vrcp.pop %v2193
      %v2216 = vmul.f32 %v2193, %v2215
      %v2217 = vsub.f32 1.0, %v2216
      %v2218 = vmul.f32 %v2215, %v2217
      %v2219 = vadd.f32 %v2215, %v2218
      %vm2220 = vweird.f32 %v2193
      %vm2221 = vweird.f32 %v2215
      %vm2222 = vmor %vm2220, %vm2221
      %v2223 = vsel %vm2222, %v2215, %v2219
      %v2224 = vand.u32 2147483647, %v2193
      %vm2225 = vcmp.eq.f32.partialorder %v2224, 8.507059e+37
      %v2226 = vand.u32 %v2193, 2147483648
      %v2227 = vor.u32 1.1754944e-38, %v2226
      %v2228 = vsel %vm2225, %v2227, %v2223
      %v2229 = vmul.f32 %v2176, %v2228
      %v2230 = vrcp.pop %v2196
      %v2231 = vmul.f32 %v2196, %v2230
      %v2232 = vsub.f32 1.0, %v2231
      %v2233 = vmul.f32 %v2230, %v2232
      %v2234 = vadd.f32 %v2230, %v2233
      %vm2235 = vweird.f32 %v2196
      %vm2236 = vweird.f32 %v2230
      %vm2237 = vmor %vm2235, %vm2236
      %v2238 = vsel %vm2237, %v2230, %v2234
      %v2239 = vand.u32 2147483647, %v2196
      %vm2240 = vcmp.eq.f32.partialorder %v2239, 8.507059e+37
      %v2241 = vand.u32 %v2196, 2147483648
      %v2242 = vor.u32 1.1754944e-38, %v2241
      %v2243 = vsel %vm2240, %v2242, %v2238
      %v2244 = vmul.f32 %v2178, %v2243
      %v2245 = vrcp.pop %v2199
      %v2246 = vmul.f32 %v2199, %v2245
      %v2247 = vsub.f32 1.0, %v2246
      %v2248 = vmul.f32 %v2245, %v2247
      %v2249 = vadd.f32 %v2245, %v2248
      %vm2250 = vweird.f32 %v2199
      %vm2251 = vweird.f32 %v2245
      %vm2252 = vmor %vm2250, %vm2251
      %v2253 = vsel %vm2252, %v2245, %v2249
      %v2254 = vand.u32 2147483647, %v2199
      %vm2255 = vcmp.eq.f32.partialorder %v2254, 8.507059e+37
      %v2256 = vand.u32 %v2199, 2147483648
      %v2257 = vor.u32 1.1754944e-38, %v2256
      %v2258 = vsel %vm2255, %v2257, %v2253
      %v2259 = vmul.f32 %v2180, %v2258
      %v2260 = vrcp.pop %v2202
      %v2261 = vmul.f32 %v2202, %v2260
      %v2262 = vsub.f32 1.0, %v2261
      %v2263 = vmul.f32 %v2260, %v2262
      %v2264 = vadd.f32 %v2260, %v2263
      %vm2265 = vweird.f32 %v2202
      %vm2266 = vweird.f32 %v2260
      %vm2267 = vmor %vm2265, %vm2266
      %v2268 = vsel %vm2267, %v2260, %v2264
      %v2269 = vand.u32 2147483647, %v2202
      %vm2270 = vcmp.eq.f32.partialorder %v2269, 8.507059e+37
      %v2271 = vand.u32 %v2202, 2147483648
      %v2272 = vor.u32 1.1754944e-38, %v2271
      %v2273 = vsel %vm2270, %v2272, %v2268
      %v2274 = vmul.f32 %v2182, %v2273
      %v2275 = vrcp.pop %v2205
      %v2276 = vmul.f32 %v2205, %v2275
      %v2277 = vsub.f32 1.0, %v2276
      %v2278 = vmul.f32 %v2275, %v2277
      %v2279 = vadd.f32 %v2275, %v2278
      %vm2280 = vweird.f32 %v2205
      %vm2281 = vweird.f32 %v2275
      %vm2282 = vmor %vm2280, %vm2281
      %v2283 = vsel %vm2282, %v2275, %v2279
      %v2284 = vand.u32 2147483647, %v2205
      %vm2285 = vcmp.eq.f32.partialorder %v2284, 8.507059e+37
      %v2286 = vand.u32 %v2205, 2147483648
      %v2287 = vor.u32 1.1754944e-38, %v2286
      %v2288 = vsel %vm2285, %v2287, %v2283
      %v2289 = vmul.f32 %v2184, %v2288
      %v2290 = vrcp.pop %v2208
      %v2291 = vmul.f32 %v2208, %v2290
      %v2292 = vsub.f32 1.0, %v2291
      %v2293 = vmul.f32 %v2290, %v2292
      %v2294 = vadd.f32 %v2290, %v2293
      %vm2295 = vweird.f32 %v2208
      %vm2296 = vweird.f32 %v2290
      %vm2297 = vmor %vm2295, %vm2296
      %v2298 = vsel %vm2297, %v2290, %v2294
      %v2299 = vand.u32 2147483647, %v2208
      %vm2300 = vcmp.eq.f32.partialorder %v2299, 8.507059e+37
      %v2301 = vand.u32 %v2208, 2147483648
      %v2302 = vor.u32 1.1754944e-38, %v2301
      %v2303 = vsel %vm2300, %v2302, %v2298
      %v2304 = vmul.f32 %v2186, %v2303
      %v2305 = vrcp.pop %v2211
      %v2306 = vmul.f32 %v2211, %v2305
      %v2307 = vsub.f32 1.0, %v2306
      %v2308 = vmul.f32 %v2305, %v2307
      %v2309 = vadd.f32 %v2305, %v2308
      %vm2310 = vweird.f32 %v2211
      %vm2311 = vweird.f32 %v2305
      %vm2312 = vmor %vm2310, %vm2311
      %v2313 = vsel %vm2312, %v2305, %v2309
      %v2314 = vand.u32 2147483647, %v2211
      %vm2315 = vcmp.eq.f32.partialorder %v2314, 8.507059e+37
      %v2316 = vand.u32 %v2211, 2147483648
      %v2317 = vor.u32 1.1754944e-38, %v2316
      %v2318 = vsel %vm2315, %v2317, %v2313
      %v2319 = vmul.f32 %v2188, %v2318
      %v2320 = vrcp.pop %v2214
      %v2321 = vmul.f32 %v2214, %v2320
      %v2322 = vsub.f32 1.0, %v2321
      %v2323 = vmul.f32 %v2320, %v2322
      %v2324 = vadd.f32 %v2320, %v2323
      %vm2325 = vweird.f32 %v2214
      %vm2326 = vweird.f32 %v2320
      %vm2327 = vmor %vm2325, %vm2326
      %v2328 = vsel %vm2327, %v2320, %v2324
      %v2329 = vand.u32 2147483647, %v2214
      %vm2330 = vcmp.eq.f32.partialorder %v2329, 8.507059e+37
      %v2331 = vand.u32 %v2214, 2147483648
      %v2332 = vor.u32 1.1754944e-38, %v2331
      %v2333 = vsel %vm2330, %v2332, %v2328
      %v2334 = vmul.f32 %v2190, %v2333
      %v2335 = vpack.c.bf16 %v2244, %v2229
      %v2336 = vpack.c.bf16 %v2274, %v2259
      %v2337 = vpack.c.bf16 %v2304, %v2289
      %v2338 = vpack.c.bf16 %v2334, %v2319
      %2339 = vrot.lane.b32.xlu0 %v1008, 32
      %v2340 = vpop.permute.xlu0 %2339
      %v2342 = vsel %vm815, %v2335, 0
      %v2345 = vsel %vm815, %v2336, 0
      %v2348 = vsel %vm815, %v2337, 0
      %v2351 = vsel %vm815, %v2338, 0
      %v2354 = vsel %vm1025, %v2340, 0
      %2356 = vmatpush.bf16.msra.mxu0 0
      %2357 = vmatpush.bf16.msra.mxu0 0
      %2358 = vmatpush.bf16.msra.mxu0 0
      %2359 = vmatpush.bf16.msra.mxu0 0
      %2360 = vmatpush.bf16.msra.mxu0 0
      %2361 = vmatpush.bf16.msra.mxu0 0
      %2362 = vmatpush.bf16.msra.mxu0 0
      %2363 = vmatpush.bf16.msra.mxu0 %v2354
      %2364 = vmatmul.bf16.gmra.mxu0 %v2342
      %v2365 = vpop.f32.mrf.mxu0
      %v2366 = vadd.f32 0.0, %v2365
      %v2367 = vpop.f32.mrf.mxu0
      %v2368 = vadd.f32 0.0, %v2367
      %2369 = vmatmul.bf16.gmra.mxu0 %v2345
      %v2370 = vpop.f32.mrf.mxu0
      %v2371 = vadd.f32 0.0, %v2370
      %v2372 = vpop.f32.mrf.mxu0
      %v2373 = vadd.f32 0.0, %v2372
      %2374 = vmatmul.bf16.gmra.mxu0 %v2348
      %v2375 = vpop.f32.mrf.mxu0
      %v2376 = vadd.f32 0.0, %v2375
      %v2377 = vpop.f32.mrf.mxu0
      %v2378 = vadd.f32 0.0, %v2377
      %2379 = vmatmul.bf16.gmra.mxu0 %v2351
      %v2380 = vpop.f32.mrf.mxu0
      %v2381 = vadd.f32 0.0, %v2380
      %v2382 = vpop.f32.mrf.mxu0
      %v2383 = vadd.f32 0.0, %v2382
      %2384 = vdwg.mxu0
      %2393 = vrot.lane.b32.xlu0 %v1514, 32
      %v2394 = vpop.permute.xlu0 %2393
      %2395 = vrot.lane.b32.xlu0 %v1516, 32
      %v2396 = vpop.permute.xlu0 %2395
      %2397 = vrot.lane.b32.xlu0 %v1519, 32
      %v2398 = vpop.permute.xlu0 %2397
      %2399 = vrot.lane.b32.xlu0 %v1521, 32
      %v2400 = vpop.permute.xlu0 %2399
      %2401 = vrot.lane.b32.xlu0 %v1524, 32
      %v2402 = vpop.permute.xlu0 %2401
      %2403 = vrot.lane.b32.xlu0 %v1526, 32
      %v2404 = vpop.permute.xlu0 %2403
      %2405 = vrot.lane.b32.xlu0 %v1529, 32
      %v2406 = vpop.permute.xlu0 %2405
      %2407 = vrot.lane.b32.xlu0 %v1531, 32
      %v2408 = vpop.permute.xlu0 %2407
      %2425 = vrot.lane.b32.xlu0 %v1940, 64
      %v2426 = vpop.permute.xlu0 %2425
      %2427 = vrot.lane.b32.xlu0 %v1942, 64
      %v2428 = vpop.permute.xlu0 %2427
      %2429 = vrot.lane.b32.xlu0 %v1945, 64
      %v2430 = vpop.permute.xlu0 %2429
      %2431 = vrot.lane.b32.xlu0 %v1947, 64
      %v2432 = vpop.permute.xlu0 %2431
      %2433 = vrot.lane.b32.xlu0 %v1950, 64
      %v2434 = vpop.permute.xlu0 %2433
      %2435 = vrot.lane.b32.xlu0 %v1952, 64
      %v2436 = vpop.permute.xlu0 %2435
      %2437 = vrot.lane.b32.xlu0 %v1955, 64
      %v2438 = vpop.permute.xlu0 %2437
      %2439 = vrot.lane.b32.xlu0 %v1957, 64
      %v2440 = vpop.permute.xlu0 %2439
      %2457 = vrot.lane.b32.xlu0 %v2366, 96
      %v2458 = vpop.permute.xlu0 %2457
      %2459 = vrot.lane.b32.xlu0 %v2368, 96
      %v2460 = vpop.permute.xlu0 %2459
      %2461 = vrot.lane.b32.xlu0 %v2371, 96
      %v2462 = vpop.permute.xlu0 %2461
      %2463 = vrot.lane.b32.xlu0 %v2373, 96
      %v2464 = vpop.permute.xlu0 %2463
      %2465 = vrot.lane.b32.xlu0 %v2376, 96
      %v2466 = vpop.permute.xlu0 %2465
      %2467 = vrot.lane.b32.xlu0 %v2378, 96
      %v2468 = vpop.permute.xlu0 %2467
      %2469 = vrot.lane.b32.xlu0 %v2381, 96
      %v2470 = vpop.permute.xlu0 %2469
      %2471 = vrot.lane.b32.xlu0 %v2383, 96
      %v2472 = vpop.permute.xlu0 %2471
      %v2481 = vsel %vm662, %v1039, %v2394
      %v2482 = vsel %vm662, %v1041, %v2396
      %v2483 = vsel %vm662, %v1044, %v2398
      %v2484 = vsel %vm662, %v1046, %v2400
      %v2485 = vsel %vm662, %v1049, %v2402
      %v2486 = vsel %vm662, %v1051, %v2404
      %v2487 = vsel %vm662, %v1054, %v2406
      %v2488 = vsel %vm662, %v1056, %v2408
      %vm2489 = vcmask 523264
      %v2490 = vsel %vm2489, %v2481, %v2426
      %v2491 = vsel %vm2489, %v2482, %v2428
      %v2492 = vsel %vm2489, %v2483, %v2430
      %v2493 = vsel %vm2489, %v2484, %v2432
      %v2494 = vsel %vm2489, %v2485, %v2434
      %v2495 = vsel %vm2489, %v2486, %v2436
      %v2496 = vsel %vm2489, %v2487, %v2438
      %v2497 = vsel %vm2489, %v2488, %v2440
      %vm2498 = vcmask 785408
      %v2499 = vsel %vm2498, %v2490, %v2458
      %v2500 = vsel %vm2498, %v2491, %v2460
      %v2501 = vsel %vm2498, %v2492, %v2462
      %v2502 = vsel %vm2498, %v2493, %v2464
      %v2503 = vsel %vm2498, %v2494, %v2466
      %v2504 = vsel %vm2498, %v2495, %v2468
      %v2505 = vsel %vm2498, %v2496, %v2470
      %v2506 = vsel %vm2498, %v2497, %v2472
      %v2507 = vpack.c.bf16 %v2500, %v2499
      %v2508 = vpack.c.bf16 %v2502, %v2501
      %v2509 = vpack.c.bf16 %v2504, %v2503
      %v2510 = vpack.c.bf16 %v2506, %v2505
      %v2511 = vld [vmem:[%s6] sm:$0xff]
      %v2512 = vld [vmem:[%s6 + $0x8] sm:$0xff]
      %v2513 = vld [vmem:[%s6 + $0x10] sm:$0xff]
      %v2514 = vld [vmem:[%s6 + $0x18] sm:$0xff]
      %v2515 = vld [vmem:[%s6 + $0x20] sm:$0xff]
      %v2516 = vld [vmem:[%s6 + $0x28] sm:$0xff]
      %v2517 = vld [vmem:[%s6 + $0x30] sm:$0xff]
      %v2518 = vld [vmem:[%s6 + $0x38] sm:$0xff]
      %v2519 = vld [vmem:[%s6 + $0x40] sm:$0xff]
      %v2520 = vld [vmem:[%s6 + $0x48] sm:$0xff]
      %v2521 = vld [vmem:[%s6 + $0x50] sm:$0xff]
      %v2522 = vld [vmem:[%s6 + $0x58] sm:$0xff]
      %v2523 = vld [vmem:[%s6 + $0x60] sm:$0xff]
      %v2524 = vld [vmem:[%s6 + $0x68] sm:$0xff]
      %v2525 = vld [vmem:[%s6 + $0x70] sm:$0xff]
      %v2526 = vld [vmem:[%s6 + $0x78] sm:$0xff]
      %v2527 = vld [vmem:[%s7] sm:$0x3]
      %v2529 = vperm.slane %v2527, 0
      %v2530 = vperm.slane %v2527, 1
      %v2549 = vunpack.c.l.b16 %v2511
      %v2550 = vunpack.c.h.b16 %v2511
      %v2551 = vunpack.c.l.b16 %v2512
      %v2552 = vunpack.c.h.b16 %v2512
      %v2553 = vunpack.c.l.b16 %v2513
      %v2554 = vunpack.c.h.b16 %v2513
      %v2555 = vunpack.c.l.b16 %v2514
      %v2556 = vunpack.c.h.b16 %v2514
      %v2557 = vunpack.c.l.b16 %v2515
      %v2558 = vunpack.c.h.b16 %v2515
      %v2559 = vunpack.c.l.b16 %v2516
      %v2560 = vunpack.c.h.b16 %v2516
      %v2561 = vunpack.c.l.b16 %v2517
      %v2562 = vunpack.c.h.b16 %v2517
      %v2563 = vunpack.c.l.b16 %v2518
      %v2564 = vunpack.c.h.b16 %v2518
      %v2565 = vunpack.c.l.b16 %v2519
      %v2566 = vunpack.c.h.b16 %v2519
      %v2567 = vunpack.c.l.b16 %v2520
      %v2568 = vunpack.c.h.b16 %v2520
      %v2569 = vunpack.c.l.b16 %v2521
      %v2570 = vunpack.c.h.b16 %v2521
      %v2571 = vunpack.c.l.b16 %v2522
      %v2572 = vunpack.c.h.b16 %v2522
      %v2573 = vunpack.c.l.b16 %v2523
      %v2574 = vunpack.c.h.b16 %v2523
      %v2575 = vunpack.c.l.b16 %v2524
      %v2576 = vunpack.c.h.b16 %v2524
      %v2577 = vunpack.c.l.b16 %v2525
      %v2578 = vunpack.c.h.b16 %v2525
      %v2579 = vunpack.c.l.b16 %v2526
      %v2580 = vunpack.c.h.b16 %v2526
      %v2581 = vpack.c.b16 %v2551, %v2549
      %v2582 = vpack.c.b16 %v2552, %v2550
      %v2583 = vpack.c.b16 %v2555, %v2553
      %v2584 = vpack.c.b16 %v2556, %v2554
      %v2585 = vpack.c.b16 %v2559, %v2557
      %v2586 = vpack.c.b16 %v2560, %v2558
      %v2587 = vpack.c.b16 %v2563, %v2561
      %v2588 = vpack.c.b16 %v2564, %v2562
      %v2589 = vpack.c.b16 %v2567, %v2565
      %v2590 = vpack.c.b16 %v2568, %v2566
      %v2591 = vpack.c.b16 %v2571, %v2569
      %v2592 = vpack.c.b16 %v2572, %v2570
      %v2593 = vpack.c.b16 %v2575, %v2573
      %v2594 = vpack.c.b16 %v2576, %v2574
      %v2595 = vpack.c.b16 %v2579, %v2577
      %v2596 = vpack.c.b16 %v2580, %v2578
      %2613 = vmatpush.bf16.msra.mxu0 %v2595
      %2614 = vmatpush.bf16.msra.mxu0 %v2593
      %2615 = vmatpush.bf16.msra.mxu0 %v2591
      %2616 = vmatpush.bf16.msra.mxu0 %v2589
      %2617 = vmatpush.bf16.msra.mxu0 %v2587
      %2618 = vmatpush.bf16.msra.mxu0 %v2585
      %2619 = vmatpush.bf16.msra.mxu0 %v2583
      %2620 = vmatpush.bf16.msra.mxu0 %v2581
      %2621 = vmatmul.bf16.gmra.mxu0 %v2507
      %v2622 = vpop.f32.mrf.mxu0
      %v2623 = vadd.f32 %v2529, %v2622
      %v2624 = vpop.f32.mrf.mxu0
      %v2625 = vadd.f32 %v2529, %v2624
      %2626 = vmatmul.bf16.gmra.mxu0 %v2508
      %v2627 = vpop.f32.mrf.mxu0
      %v2628 = vadd.f32 %v2529, %v2627
      %v2629 = vpop.f32.mrf.mxu0
      %v2630 = vadd.f32 %v2529, %v2629
      %2631 = vmatmul.bf16.gmra.mxu0 %v2509
      %v2632 = vpop.f32.mrf.mxu0
      %v2633 = vadd.f32 %v2529, %v2632
      %v2634 = vpop.f32.mrf.mxu0
      %v2635 = vadd.f32 %v2529, %v2634
      %2636 = vmatmul.bf16.gmra.mxu0 %v2510
      %v2637 = vpop.f32.mrf.mxu0
      %v2638 = vadd.f32 %v2529, %v2637
      %v2639 = vpop.f32.mrf.mxu0
      %v2640 = vadd.f32 %v2529, %v2639
      %2641 = vdwg.mxu0
      %2642 = vmatpush.bf16.msra.mxu0 %v2596
      %2643 = vmatpush.bf16.msra.mxu0 %v2594
      %2644 = vmatpush.bf16.msra.mxu0 %v2592
      %2645 = vmatpush.bf16.msra.mxu0 %v2590
      %2646 = vmatpush.bf16.msra.mxu0 %v2588
      %2647 = vmatpush.bf16.msra.mxu0 %v2586
      %2648 = vmatpush.bf16.msra.mxu0 %v2584
      %2649 = vmatpush.bf16.msra.mxu0 %v2582
      %2650 = vmatmul.bf16.gmra.mxu0 %v2507
      %v2651 = vpop.f32.mrf.mxu0
      %v2652 = vadd.f32 %v2530, %v2651
      %v2653 = vpop.f32.mrf.mxu0
      %v2654 = vadd.f32 %v2530, %v2653
      %2655 = vmatmul.bf16.gmra.mxu0 %v2508
      %v2656 = vpop.f32.mrf.mxu0
      %v2657 = vadd.f32 %v2530, %v2656
      %v2658 = vpop.f32.mrf.mxu0
      %v2659 = vadd.f32 %v2530, %v2658
      %2660 = vmatmul.bf16.gmra.mxu0 %v2509
      %v2661 = vpop.f32.mrf.mxu0
      %v2662 = vadd.f32 %v2530, %v2661
      %v2663 = vpop.f32.mrf.mxu0
      %v2664 = vadd.f32 %v2530, %v2663
      %2665 = vmatmul.bf16.gmra.mxu0 %v2510
      %v2666 = vpop.f32.mrf.mxu0
      %v2667 = vadd.f32 %v2530, %v2666
      %v2668 = vpop.f32.mrf.mxu0
      %v2669 = vadd.f32 %v2530, %v2668
      %2670 = vdwg.mxu0
      %v2671 = vld [vmem:[%s8] sm:$0xff]
      %v2672 = vmul.f32 %v2623, %v2671
      %v2673 = vmul.f32 %v2625, %v2671
      %v2674 = vmul.f32 %v2628, %v2671
      %v2675 = vmul.f32 %v2630, %v2671
      %v2676 = vmul.f32 %v2633, %v2671
      %v2677 = vmul.f32 %v2635, %v2671
      %v2678 = vmul.f32 %v2638, %v2671
      %v2679 = vmul.f32 %v2640, %v2671
      %v2680 = vld [vmem:[%s9] sm:$0xff]
      %v2681 = vmul.f32 %v2652, %v2680
      %v2682 = vmul.f32 %v2654, %v2680
      %v2683 = vmul.f32 %v2657, %v2680
      %v2684 = vmul.f32 %v2659, %v2680
      %v2685 = vmul.f32 %v2662, %v2680
      %v2686 = vmul.f32 %v2664, %v2680
      %v2687 = vmul.f32 %v2667, %v2680
      %v2688 = vmul.f32 %v2669, %v2680
      %v2689 = vadd.f32 %v2672, %v2681
      %v2690 = vadd.f32 %v2673, %v2682
      %v2691 = vadd.f32 %v2674, %v2683
      %v2692 = vadd.f32 %v2675, %v2684
      %v2693 = vadd.f32 %v2676, %v2685
      %v2694 = vadd.f32 %v2677, %v2686
      %v2695 = vadd.f32 %v2678, %v2687
      %v2696 = vadd.f32 %v2679, %v2688
      %2697 = vst [vmem:[%s361] sm:$0xff] %v2689
      %2698 = vst [vmem:[%s361 + $0x8] sm:$0xff] %v2690
      %2699 = vst [vmem:[%s361 + $0x10] sm:$0xff] %v2691
      %2700 = vst [vmem:[%s361 + $0x18] sm:$0xff] %v2692
      %2701 = vst [vmem:[%s361 + $0x20] sm:$0xff] %v2693
      %2702 = vst [vmem:[%s361 + $0x28] sm:$0xff] %v2694
      %2703 = vst [vmem:[%s361 + $0x30] sm:$0xff] %v2695
      %2704 = vst [vmem:[%s361 + $0x38] sm:$0xff] %v2696
      %s2705 = smul.u32 8, %s21
      %p2706 = scmp.lt.s32.totalorder %s2705, 15
      %s2707 = scalar_select %p2706, %s2705, 15
      %s2708 = smul.addr %s2707, 8
      %s2709 = scalar_lea.vmem %s10, %s2708
      // Predicated region
      $region61: #{coordinate_attention_forward.3} parent=59 // pred_check
        %p2710 = pneg %p254
      $region62: #{coordinate_attention_forward.3} parent=59 // pred_check_branch
        %2712 = sbr.rel (%p2710) target = $region64
      $region63: #{coordinate_attention_forward.3} parent=59 // pred_region
        %s2713 = smul.u32 8, %s21
      $region64: #{coordinate_attention_forward.3} parent=59 // pred_fallthru
        _
    $region60: #{coordinate_attention_forward.3} parent=5 // pred_fallthru
      _
    %p2714 = scmp.le.s32.totalorder 2, %s16
    // Predicated region
    $region65: #{coordinate_attention_forward.3} parent=5 // pred_check
      %p2715 = pneg %p2714
    $region66: #{coordinate_attention_forward.3} parent=5 // pred_check_branch
      %2717 = sbr.rel (%p2715) target = $region68
    $region67: #{coordinate_attention_forward.3} parent=5 // pred_region
      %s2718 = ssub.s32 %s16, 2
      // Predicated region
      $region69: #{coordinate_attention_forward.3} parent=67 // pred_check
        %p2719 = pneg %p260
      $region70: #{coordinate_attention_forward.3} parent=67 // pred_check_branch
        %2721 = sbr.rel (%p2719) target = $region72
      $region71: #{coordinate_attention_forward.3} parent=67 // pred_region
        %s2722 = smul.u32 8, %s22
        %p2723 = scmp.lt.s32.totalorder %s2722, 15
        %s2724 = scalar_select %p2723, %s2722, 15
        %s2725 = smul.addr %s2724, 8
        %s2726 = scalar_lea.vmem %s10, %s2725
      $region72: #{coordinate_attention_forward.3} parent=67 // pred_fallthru
        _
    $region68: #{coordinate_attention_forward.3} parent=5 // pred_fallthru
      _
  $region6: #{coordinate_attention_forward.3} parent=0 // loop_footer
    %s20 = sadd.s32 1, %s16
  $region7: #{coordinate_attention_forward.3} parent=0 // loop_footer_branch
    %15 = sbr.rel target = $region3
  $region8: #{coordinate_attention_forward.3} parent=0 // loop_exit
    _

</llo_original>
